<compile_context>
chip_gen: v5e
topology: v5e:2x2
jax: 0.10.0
libtpu: 0.0.40
codegen_flags: <defaults>
</compile_context>

<pallas_src>
import jax
import jax.numpy as jnp
from jax import lax
from jax.experimental import pallas as pl
from jax.experimental.pallas import tpu as pltpu

HIDDEN_SIZE = 64
INPUT_SIZE = 1
NUM_LAYERS = 2
OUTPUT_SIZE = 3


def _lstm_fc_kernel(x_ref,
                    wih0_ref, whh0_ref, b0_ref,
                    w1_ref, b1_ref,
                    wfc_ref, bfc_ref,
                    out_ref):
    """2-layer LSTM over time + final Linear on the last hidden state.

    x_ref:   (TB, T)      one batch tile of the (B, T) input (INPUT_SIZE==1 squeezed)
    wih0:    (1, 4H)      layer-0 input weight (pre-transposed)
    whh0:    (H, 4H)      layer-0 recurrent weight (pre-transposed)
    b0:      (1, 4H)      layer-0 bias (b_ih + b_hh)
    w1:      (2H, 4H)     fused [W_ih1; W_hh1] (pre-stacked, pre-transposed)
    b1:      (1, 4H)      layer-1 bias (b_ih + b_hh)
    wfc:     (H, O), bfc: (1, O)
    out_ref: (TB, O)
    """
    H = HIDDEN_SIZE
    TB, T = x_ref.shape

    x = x_ref[...]                       # (TB, T) f32
    wfc = wfc_ref[...]                   # (H, O)
    bfc = bfc_ref[...]                   # (1, O)

    # --- hoisted out of the time loop ------------------------------------
    # Gate scale: 0.5 on the sigmoid gates (i, f, o), 1.0 on the tanh gate (g).
    # sigmoid(z) = 0.5*tanh(z/2) + 0.5  => pre-halving the i/f/o columns lets a
    # single full-width tanh serve all four gates.
    lane = lax.broadcasted_iota(jnp.int32, (1, 4 * H), 1)
    is_g = (lane >= 2 * H) & (lane < 3 * H)
    scale = jnp.where(is_g, jnp.float32(1.0), jnp.float32(0.5))   # (1, 4H)

    wih0 = wih0_ref[...] * scale         # (1, 4H)
    whh0 = whh0_ref[...] * scale         # (H, 4H)
    b0 = b0_ref[...] * scale             # (1, 4H)
    w1 = w1_ref[...] * scale             # (2H, 4H)
    b1 = b1_ref[...] * scale             # (1, 4H)

    # Layer-0 input projection for all timesteps (b0 folded in): (T, TB, 4H).
    # INPUT_SIZE == 1  =>  x_t @ W_ih0 is just an outer-product broadcast mul.
    xw0 = x.T[:, :, None] * wih0[0] + b0            # (T, TB, 4H)

    # Layer-1 bias broadcast, done once.
    b1_b = jnp.broadcast_to(b1, (TB, 4 * H))        # (TB, 4H)

    def combine(t_acts, c):
        # t_acts = tanh(scaled pre-activations); map i/f/o back through the
        # sigmoid identity with cheap 64-lane affine ops (no extra EUP pass).
        i = 0.5 * t_acts[:, 0 * H:1 * H] + 0.5
        f = 0.5 * t_acts[:, 1 * H:2 * H] + 0.5
        g = t_acts[:, 2 * H:3 * H]
        o = 0.5 * t_acts[:, 3 * H:4 * H] + 0.5
        c_new = f * c + i * g
        h_new = o * jnp.tanh(c_new)
        return h_new, c_new

    zeros = jnp.zeros((TB, H), jnp.float32)
    h0, c0, h1, c1 = zeros, zeros, zeros, zeros

    # Static unroll over time (T is known at trace time): layer-0 of step t+1
    # can overlap layer-1 of step t; per-step indices are static.
    for t in range(T):
        # Layer 0: only the recurrent matmul remains on the serial chain.
        g0 = xw0[t] + jnp.dot(h0, whh0, preferred_element_type=jnp.float32)
        h0, c0 = combine(jnp.tanh(g0), c0)          # one full-width tanh

        # Layer 1: one fused K=2H=128 matmul per step.
        hcat = jnp.concatenate([h0, h1], axis=-1)                 # (TB, 2H)
        g1 = jnp.dot(hcat, w1, preferred_element_type=jnp.float32) + b1_b
        h1, c1 = combine(jnp.tanh(g1), c1)          # one full-width tanh

    # fc(out[:, -1, :]) : last-timestep hidden of the top layer.
    out = jnp.dot(h1, wfc, preferred_element_type=jnp.float32) + bfc
    out_ref[...] = out.astype(out_ref.dtype)


def _pick_block_batch(B):
    for tb in (256, 128, 64, 32, 16, 8):
        if B % tb == 0:
            return tb
    return B  # small / odd batches: single block covering the full batch


def lstm_model_forward(x, params):
    """x: (B, T, INPUT_SIZE) or (B, T) float32. Returns (B, OUTPUT_SIZE) float32."""
    if x.ndim == 3:
        x = x[..., 0]                                 # drop the size-1 feature dim
    x = x.astype(jnp.float32)
    B, T = x.shape

    TB = _pick_block_batch(B)
    grid = (B // TB,)

    # Fuse layer-1 weights once: [W_ih1; W_hh1] -> (2H, 4H).
    w1 = jnp.concatenate([params["wih1"], params["whh1"]], axis=0)

    def full_spec(arr):
        return pl.BlockSpec(arr.shape, lambda b: (0, 0))

    return pl.pallas_call(
        _lstm_fc_kernel,
        out_shape=jax.ShapeDtypeStruct((B, OUTPUT_SIZE), jnp.float32),
        grid=grid,
        in_specs=[
            pl.BlockSpec((TB, T), lambda b: (b, 0)),   # x batch tile
            full_spec(params["wih0"]),
            full_spec(params["whh0"]),
            full_spec(params["b0"]),
            full_spec(w1),
            full_spec(params["b1"]),
            full_spec(params["wfc"]),
            full_spec(params["bfc"]),
        ],
        out_specs=pl.BlockSpec((TB, OUTPUT_SIZE), lambda b: (b, 0)),
        compiler_params=pltpu.CompilerParams(
            dimension_semantics=("parallel",)),        # megacore shard on v7x
    )(x, params["wih0"], params["whh0"], params["b0"],
      w1, params["b1"], params["wfc"], params["bfc"])


def init_params(key):
    """Deterministic init matching PyTorch nn.LSTM / nn.Linear shapes.

    PyTorch stores weight_ih_l{k}: (4H, in), weight_hh_l{k}: (4H, H), biases (4H,).
    We pre-transpose to (in, 4H)/(H, 4H) and fold b_ih + b_hh into one (1, 4H) bias.
    """
    H, I, O = HIDDEN_SIZE, INPUT_SIZE, OUTPUT_SIZE
    k = 1.0 / jnp.sqrt(jnp.float32(H))
    keys = jax.random.split(key, 10)

    def u(kk, shape):
        return jax.random.uniform(kk, shape, jnp.float32, -k, k)

    return {
        "wih0": u(keys[0], (I, 4 * H)),
        "whh0": u(keys[1], (H, 4 * H)),
        "b0":   u(keys[2], (1, 4 * H)) + u(keys[3], (1, 4 * H)),
        "wih1": u(keys[4], (H, 4 * H)),
        "whh1": u(keys[5], (H, 4 * H)),
        "b1":   u(keys[6], (1, 4 * H)) + u(keys[7], (1, 4 * H)),
        "wfc":  u(keys[8], (H, O)),
        "bfc":  u(keys[9], (1, O)),
    }


def reference_forward(x, params):
    """Pure-JAX reference of the same forward (correctness sanity check)."""
    H = HIDDEN_SIZE
    B, T, _ = x.shape

    def cell(x_t, h, c, wih, whh, b):
        g = x_t @ wih + h @ whh + b
        i = jax.nn.sigmoid(g[:, 0 * H:1 * H])
        f = jax.nn.sigmoid(g[:, 1 * H:2 * H])
        gg = jnp.tanh(g[:, 2 * H:3 * H])
        o = jax.nn.sigmoid(g[:, 3 * H:4 * H])
        c = f * c + i * gg
        h = o * jnp.tanh(c)
        return h, c

    h0 = c0 = h1 = c1 = jnp.zeros((B, H), jnp.float32)
    for t in range(T):
        x_t = x[:, t, :]
        h0, c0 = cell(x_t, h0, c0, params["wih0"], params["whh0"], params["b0"])
        h1, c1 = cell(h0, h1, c1, params["wih1"], params["whh1"], params["b1"])
    return h1 @ params["wfc"] + params["bfc"]


if __name__ == "__main__":
    key = jax.random.PRNGKey(0)
    k_param, k_x = jax.random.split(key)

    # B=8 fills all 8 sublanes per vreg; T=8 timesteps.
    B, T = 8, 8
    x = jax.random.normal(k_x, (B, T, INPUT_SIZE), jnp.float32)
    params = init_params(k_param)

    out = jax.block_until_ready(lstm_model_forward(x, params))
    ref = reference_forward(x, params)

    assert out.shape == (B, OUTPUT_SIZE)
    assert jnp.allclose(out, ref, atol=1e-4, rtol=1e-4), "mismatch vs JAX reference"

    print("KERNEL_OK")
</pallas_src>

<mosaic_0001>
module attributes {stable_mosaic.version = 11 : i64} {
  func.func @_lstm_fc_kernel(%arg0: i32, %arg1: memref<8x8xf32, #tpu.memory_space<vmem>>, %arg2: memref<1x256xf32, #tpu.memory_space<vmem>>, %arg3: memref<64x256xf32, #tpu.memory_space<vmem>>, %arg4: memref<1x256xf32, #tpu.memory_space<vmem>>, %arg5: memref<128x256xf32, #tpu.memory_space<vmem>>, %arg6: memref<1x256xf32, #tpu.memory_space<vmem>>, %arg7: memref<64x3xf32, #tpu.memory_space<vmem>>, %arg8: memref<1x3xf32, #tpu.memory_space<vmem>>, %arg9: memref<8x3xf32, #tpu.memory_space<vmem>>) attributes {dimension_semantics = [#tpu.dimension_semantics<parallel>], iteration_bounds = array<i64: 1>, scalar_prefetch = 0 : i64, scratch_operands = 0 : i64, tpu.core_type = #tpu.core_type<tc>, window_params = [{transform_indices = @transform_0, window_bounds = array<i64: 8, 8>}, {pipeline_mode = #tpu.pipeline_mode<synchronous>, transform_indices = @transform_1, window_bounds = array<i64: 1, 256>}, {pipeline_mode = #tpu.pipeline_mode<synchronous>, transform_indices = @transform_2, window_bounds = array<i64: 64, 256>}, {pipeline_mode = #tpu.pipeline_mode<synchronous>, transform_indices = @transform_3, window_bounds = array<i64: 1, 256>}, {pipeline_mode = #tpu.pipeline_mode<synchronous>, transform_indices = @transform_4, window_bounds = array<i64: 128, 256>}, {pipeline_mode = #tpu.pipeline_mode<synchronous>, transform_indices = @transform_5, window_bounds = array<i64: 1, 256>}, {pipeline_mode = #tpu.pipeline_mode<synchronous>, transform_indices = @transform_6, window_bounds = array<i64: 64, 3>}, {pipeline_mode = #tpu.pipeline_mode<synchronous>, transform_indices = @transform_7, window_bounds = array<i64: 1, 3>}, {transform_indices = @transform_8, window_bounds = array<i64: 8, 3>}]} {
    %c0 = arith.constant 0 : index
    %c0_0 = arith.constant 0 : index
    %0 = vector.load %arg1[%c0, %c0_0] : memref<8x8xf32, #tpu.memory_space<vmem>>, vector<8x8xf32>
    %c0_1 = arith.constant 0 : index
    %c0_2 = arith.constant 0 : index
    %1 = vector.load %arg7[%c0_1, %c0_2] : memref<64x3xf32, #tpu.memory_space<vmem>>, vector<64x3xf32>
    %c0_3 = arith.constant 0 : index
    %c0_4 = arith.constant 0 : index
    %2 = vector.load %arg8[%c0_3, %c0_4] : memref<1x3xf32, #tpu.memory_space<vmem>>, vector<1x3xf32>
    %3 = tpu.iota {dimensions = array<i32: 1>} : vector<1x256xi32>
    %c128_i32 = arith.constant 128 : i32
    %4 = vector.broadcast %c128_i32 : i32 to vector<1x256xi32>
    %5 = arith.cmpi sge, %3, %4 : vector<1x256xi32>
    %c192_i32 = arith.constant 192 : i32
    %6 = vector.broadcast %c192_i32 : i32 to vector<1x256xi32>
    %7 = arith.cmpi slt, %3, %6 : vector<1x256xi32>
    %8 = arith.andi %5, %7 : vector<1x256xi1>
    %cst = arith.constant 1.000000e+00 : f32
    %cst_5 = arith.constant 5.000000e-01 : f32
    %9 = vector.broadcast %cst : f32 to vector<1x256xf32>
    %10 = vector.broadcast %cst_5 : f32 to vector<1x256xf32>
    %11 = arith.select %8, %9, %10 : vector<1x256xi1>, vector<1x256xf32>
    %c0_6 = arith.constant 0 : index
    %c0_7 = arith.constant 0 : index
    %12 = vector.load %arg2[%c0_6, %c0_7] : memref<1x256xf32, #tpu.memory_space<vmem>>, vector<1x256xf32>
    %13 = arith.mulf %12, %11 : vector<1x256xf32>
    %c0_8 = arith.constant 0 : index
    %c0_9 = arith.constant 0 : index
    %14 = vector.load %arg3[%c0_8, %c0_9] : memref<64x256xf32, #tpu.memory_space<vmem>>, vector<64x256xf32>
    %15 = vector.broadcast %11 : vector<1x256xf32> to vector<64x256xf32>
    %16 = arith.mulf %14, %15 : vector<64x256xf32>
    %c0_10 = arith.constant 0 : index
    %c0_11 = arith.constant 0 : index
    %17 = vector.load %arg4[%c0_10, %c0_11] : memref<1x256xf32, #tpu.memory_space<vmem>>, vector<1x256xf32>
    %18 = arith.mulf %17, %11 : vector<1x256xf32>
    %c0_12 = arith.constant 0 : index
    %c0_13 = arith.constant 0 : index
    %19 = vector.load %arg5[%c0_12, %c0_13] : memref<128x256xf32, #tpu.memory_space<vmem>>, vector<128x256xf32>
    %20 = vector.broadcast %11 : vector<1x256xf32> to vector<128x256xf32>
    %21 = arith.mulf %19, %20 : vector<128x256xf32>
    %c0_14 = arith.constant 0 : index
    %c0_15 = arith.constant 0 : index
    %22 = vector.load %arg6[%c0_14, %c0_15] : memref<1x256xf32, #tpu.memory_space<vmem>>, vector<1x256xf32>
    %23 = arith.mulf %22, %11 : vector<1x256xf32>
    %24 = tpu.transpose %0, [1, 0] : vector<8x8xf32> -> vector<8x8xf32>
    %25 = vector.shape_cast %24 : vector<8x8xf32> to vector<8x8x1xf32>
    %26 = vector.shape_cast %13 : vector<1x256xf32> to vector<256xf32>
    %27 = vector.shape_cast %26 : vector<256xf32> to vector<1x1x256xf32>
    %28 = vector.broadcast %25 : vector<8x8x1xf32> to vector<8x8x256xf32>
    %29 = vector.broadcast %27 : vector<1x1x256xf32> to vector<8x8x256xf32>
    %30 = arith.mulf %28, %29 : vector<8x8x256xf32>
    %31 = vector.shape_cast %18 : vector<1x256xf32> to vector<1x1x256xf32>
    %32 = vector.broadcast %31 : vector<1x1x256xf32> to vector<8x8x256xf32>
    %33 = arith.addf %30, %32 : vector<8x8x256xf32>
    %34 = vector.shape_cast %23 : vector<1x256xf32> to vector<1x256xf32>
    %35 = vector.broadcast %34 : vector<1x256xf32> to vector<8x256xf32>
    %cst_16 = arith.constant 0.000000e+00 : f32
    %36 = vector.broadcast %cst_16 : f32 to vector<8x64xf32>
    %37 = vector.extract_strided_slice %33 {offsets = [0, 0, 0], sizes = [1, 8, 256], strides = [1, 1, 1]} : vector<8x8x256xf32> to vector<1x8x256xf32>
    %38 = vector.shape_cast %37 : vector<1x8x256xf32> to vector<8x256xf32>
    %cst_17 = arith.constant dense<0.000000e+00> : vector<8x256xf32>
    %39 = tpu.matmul %36, %16, %cst_17 {dimension_numbers = #tpu.dot_dimension_numbers<[1], [0], [0], [1], [0, 0, 1, 1], [], []>} : vector<8x64xf32>, vector<64x256xf32>, vector<8x256xf32> -> vector<8x256xf32>
    %40 = arith.addf %38, %39 : vector<8x256xf32>
    %41 = math.tanh %40 : vector<8x256xf32>
    %42 = vector.extract_strided_slice %41 {offsets = [0, 0], sizes = [8, 64], strides = [1, 1]} : vector<8x256xf32> to vector<8x64xf32>
    %cst_18 = arith.constant 5.000000e-01 : f32
    %43 = vector.broadcast %cst_18 : f32 to vector<8x64xf32>
    %44 = arith.mulf %43, %42 : vector<8x64xf32>
    %cst_19 = arith.constant 5.000000e-01 : f32
    %45 = vector.broadcast %cst_19 : f32 to vector<8x64xf32>
    %46 = arith.addf %44, %45 : vector<8x64xf32>
    %47 = vector.extract_strided_slice %41 {offsets = [0, 64], sizes = [8, 64], strides = [1, 1]} : vector<8x256xf32> to vector<8x64xf32>
    %cst_20 = arith.constant 5.000000e-01 : f32
    %48 = vector.broadcast %cst_20 : f32 to vector<8x64xf32>
    %49 = arith.mulf %48, %47 : vector<8x64xf32>
    %cst_21 = arith.constant 5.000000e-01 : f32
    %50 = vector.broadcast %cst_21 : f32 to vector<8x64xf32>
    %51 = arith.addf %49, %50 : vector<8x64xf32>
    %52 = vector.extract_strided_slice %41 {offsets = [0, 128], sizes = [8, 64], strides = [1, 1]} : vector<8x256xf32> to vector<8x64xf32>
    %53 = vector.extract_strided_slice %41 {offsets = [0, 192], sizes = [8, 64], strides = [1, 1]} : vector<8x256xf32> to vector<8x64xf32>
    %cst_22 = arith.constant 5.000000e-01 : f32
    %54 = vector.broadcast %cst_22 : f32 to vector<8x64xf32>
    %55 = arith.mulf %54, %53 : vector<8x64xf32>
    %cst_23 = arith.constant 5.000000e-01 : f32
    %56 = vector.broadcast %cst_23 : f32 to vector<8x64xf32>
    %57 = arith.addf %55, %56 : vector<8x64xf32>
    %58 = arith.mulf %51, %36 : vector<8x64xf32>
    %59 = arith.mulf %46, %52 : vector<8x64xf32>
    %60 = arith.addf %58, %59 : vector<8x64xf32>
    %61 = math.tanh %60 : vector<8x64xf32>
    %62 = arith.mulf %57, %61 : vector<8x64xf32>
    %63 = tpu.concatenate %62, %36 in 1 : vector<8x64xf32>, vector<8x64xf32> -> vector<8x128xf32>
    %cst_24 = arith.constant dense<0.000000e+00> : vector<8x256xf32>
    %64 = tpu.matmul %63, %21, %cst_24 {dimension_numbers = #tpu.dot_dimension_numbers<[1], [0], [0], [1], [0, 0, 1, 1], [], []>} : vector<8x128xf32>, vector<128x256xf32>, vector<8x256xf32> -> vector<8x256xf32>
    %65 = arith.addf %64, %35 : vector<8x256xf32>
    %66 = math.tanh %65 : vector<8x256xf32>
    %67 = vector.extract_strided_slice %66 {offsets = [0, 0], sizes = [8, 64], strides = [1, 1]} : vector<8x256xf32> to vector<8x64xf32>
    %cst_25 = arith.constant 5.000000e-01 : f32
    %68 = vector.broadcast %cst_25 : f32 to vector<8x64xf32>
    %69 = arith.mulf %68, %67 : vector<8x64xf32>
    %cst_26 = arith.constant 5.000000e-01 : f32
    %70 = vector.broadcast %cst_26 : f32 to vector<8x64xf32>
    %71 = arith.addf %69, %70 : vector<8x64xf32>
    %72 = vector.extract_strided_slice %66 {offsets = [0, 64], sizes = [8, 64], strides = [1, 1]} : vector<8x256xf32> to vector<8x64xf32>
    %cst_27 = arith.constant 5.000000e-01 : f32
    %73 = vector.broadcast %cst_27 : f32 to vector<8x64xf32>
    %74 = arith.mulf %73, %72 : vector<8x64xf32>
    %cst_28 = arith.constant 5.000000e-01 : f32
    %75 = vector.broadcast %cst_28 : f32 to vector<8x64xf32>
    %76 = arith.addf %74, %75 : vector<8x64xf32>
    %77 = vector.extract_strided_slice %66 {offsets = [0, 128], sizes = [8, 64], strides = [1, 1]} : vector<8x256xf32> to vector<8x64xf32>
    %78 = vector.extract_strided_slice %66 {offsets = [0, 192], sizes = [8, 64], strides = [1, 1]} : vector<8x256xf32> to vector<8x64xf32>
    %cst_29 = arith.constant 5.000000e-01 : f32
    %79 = vector.broadcast %cst_29 : f32 to vector<8x64xf32>
    %80 = arith.mulf %79, %78 : vector<8x64xf32>
    %cst_30 = arith.constant 5.000000e-01 : f32
    %81 = vector.broadcast %cst_30 : f32 to vector<8x64xf32>
    %82 = arith.addf %80, %81 : vector<8x64xf32>
    %83 = arith.mulf %76, %36 : vector<8x64xf32>
    %84 = arith.mulf %71, %77 : vector<8x64xf32>
    %85 = arith.addf %83, %84 : vector<8x64xf32>
    %86 = math.tanh %85 : vector<8x64xf32>
    %87 = arith.mulf %82, %86 : vector<8x64xf32>
    %88 = vector.extract_strided_slice %33 {offsets = [1, 0, 0], sizes = [1, 8, 256], strides = [1, 1, 1]} : vector<8x8x256xf32> to vector<1x8x256xf32>
    %89 = vector.shape_cast %88 : vector<1x8x256xf32> to vector<8x256xf32>
    %cst_31 = arith.constant dense<0.000000e+00> : vector<8x256xf32>
    %90 = tpu.matmul %62, %16, %cst_31 {dimension_numbers = #tpu.dot_dimension_numbers<[1], [0], [0], [1], [0, 0, 1, 1], [], []>} : vector<8x64xf32>, vector<64x256xf32>, vector<8x256xf32> -> vector<8x256xf32>
    %91 = arith.addf %89, %90 : vector<8x256xf32>
    %92 = math.tanh %91 : vector<8x256xf32>
    %93 = vector.extract_strided_slice %92 {offsets = [0, 0], sizes = [8, 64], strides = [1, 1]} : vector<8x256xf32> to vector<8x64xf32>
    %cst_32 = arith.constant 5.000000e-01 : f32
    %94 = vector.broadcast %cst_32 : f32 to vector<8x64xf32>
    %95 = arith.mulf %94, %93 : vector<8x64xf32>
    %cst_33 = arith.constant 5.000000e-01 : f32
    %96 = vector.broadcast %cst_33 : f32 to vector<8x64xf32>
    %97 = arith.addf %95, %96 : vector<8x64xf32>
    %98 = vector.extract_strided_slice %92 {offsets = [0, 64], sizes = [8, 64], strides = [1, 1]} : vector<8x256xf32> to vector<8x64xf32>
    %cst_34 = arith.constant 5.000000e-01 : f32
    %99 = vector.broadcast %cst_34 : f32 to vector<8x64xf32>
    %100 = arith.mulf %99, %98 : vector<8x64xf32>
    %cst_35 = arith.constant 5.000000e-01 : f32
    %101 = vector.broadcast %cst_35 : f32 to vector<8x64xf32>
    %102 = arith.addf %100, %101 : vector<8x64xf32>
    %103 = vector.extract_strided_slice %92 {offsets = [0, 128], sizes = [8, 64], strides = [1, 1]} : vector<8x256xf32> to vector<8x64xf32>
    %104 = vector.extract_strided_slice %92 {offsets = [0, 192], sizes = [8, 64], strides = [1, 1]} : vector<8x256xf32> to vector<8x64xf32>
    %cst_36 = arith.constant 5.000000e-01 : f32
    %105 = vector.broadcast %cst_36 : f32 to vector<8x64xf32>
    %106 = arith.mulf %105, %104 : vector<8x64xf32>
    %cst_37 = arith.constant 5.000000e-01 : f32
    %107 = vector.broadcast %cst_37 : f32 to vector<8x64xf32>
    %108 = arith.addf %106, %107 : vector<8x64xf32>
    %109 = arith.mulf %102, %60 : vector<8x64xf32>
    %110 = arith.mulf %97, %103 : vector<8x64xf32>
    %111 = arith.addf %109, %110 : vector<8x64xf32>
    %112 = math.tanh %111 : vector<8x64xf32>
    %113 = arith.mulf %108, %112 : vector<8x64xf32>
    %114 = tpu.concatenate %113, %87 in 1 : vector<8x64xf32>, vector<8x64xf32> -> vector<8x128xf32>
    %cst_38 = arith.constant dense<0.000000e+00> : vector<8x256xf32>
    %115 = tpu.matmul %114, %21, %cst_38 {dimension_numbers = #tpu.dot_dimension_numbers<[1], [0], [0], [1], [0, 0, 1, 1], [], []>} : vector<8x128xf32>, vector<128x256xf32>, vector<8x256xf32> -> vector<8x256xf32>
    %116 = arith.addf %115, %35 : vector<8x256xf32>
    %117 = math.tanh %116 : vector<8x256xf32>
    %118 = vector.extract_strided_slice %117 {offsets = [0, 0], sizes = [8, 64], strides = [1, 1]} : vector<8x256xf32> to vector<8x64xf32>
    %cst_39 = arith.constant 5.000000e-01 : f32
    %119 = vector.broadcast %cst_39 : f32 to vector<8x64xf32>
    %120 = arith.mulf %119, %118 : vector<8x64xf32>
    %cst_40 = arith.constant 5.000000e-01 : f32
    %121 = vector.broadcast %cst_40 : f32 to vector<8x64xf32>
    %122 = arith.addf %120, %121 : vector<8x64xf32>
    %123 = vector.extract_strided_slice %117 {offsets = [0, 64], sizes = [8, 64], strides = [1, 1]} : vector<8x256xf32> to vector<8x64xf32>
    %cst_41 = arith.constant 5.000000e-01 : f32
    %124 = vector.broadcast %cst_41 : f32 to vector<8x64xf32>
    %125 = arith.mulf %124, %123 : vector<8x64xf32>
    %cst_42 = arith.constant 5.000000e-01 : f32
    %126 = vector.broadcast %cst_42 : f32 to vector<8x64xf32>
    %127 = arith.addf %125, %126 : vector<8x64xf32>
    %128 = vector.extract_strided_slice %117 {offsets = [0, 128], sizes = [8, 64], strides = [1, 1]} : vector<8x256xf32> to vector<8x64xf32>
    %129 = vector.extract_strided_slice %117 {offsets = [0, 192], sizes = [8, 64], strides = [1, 1]} : vector<8x256xf32> to vector<8x64xf32>
    %cst_43 = arith.constant 5.000000e-01 : f32
    %130 = vector.broadcast %cst_43 : f32 to vector<8x64xf32>
    %131 = arith.mulf %130, %129 : vector<8x64xf32>
    %cst_44 = arith.constant 5.000000e-01 : f32
    %132 = vector.broadcast %cst_44 : f32 to vector<8x64xf32>
    %133 = arith.addf %131, %132 : vector<8x64xf32>
    %134 = arith.mulf %127, %85 : vector<8x64xf32>
    %135 = arith.mulf %122, %128 : vector<8x64xf32>
    %136 = arith.addf %134, %135 : vector<8x64xf32>
    %137 = math.tanh %136 : vector<8x64xf32>
    %138 = arith.mulf %133, %137 : vector<8x64xf32>
    %139 = vector.extract_strided_slice %33 {offsets = [2, 0, 0], sizes = [1, 8, 256], strides = [1, 1, 1]} : vector<8x8x256xf32> to vector<1x8x256xf32>
    %140 = vector.shape_cast %139 : vector<1x8x256xf32> to vector<8x256xf32>
    %cst_45 = arith.constant dense<0.000000e+00> : vector<8x256xf32>
    %141 = tpu.matmul %113, %16, %cst_45 {dimension_numbers = #tpu.dot_dimension_numbers<[1], [0], [0], [1], [0, 0, 1, 1], [], []>} : vector<8x64xf32>, vector<64x256xf32>, vector<8x256xf32> -> vector<8x256xf32>
    %142 = arith.addf %140, %141 : vector<8x256xf32>
    %143 = math.tanh %142 : vector<8x256xf32>
    %144 = vector.extract_strided_slice %143 {offsets = [0, 0], sizes = [8, 64], strides = [1, 1]} : vector<8x256xf32> to vector<8x64xf32>
    %cst_46 = arith.constant 5.000000e-01 : f32
    %145 = vector.broadcast %cst_46 : f32 to vector<8x64xf32>
    %146 = arith.mulf %145, %144 : vector<8x64xf32>
    %cst_47 = arith.constant 5.000000e-01 : f32
    %147 = vector.broadcast %cst_47 : f32 to vector<8x64xf32>
    %148 = arith.addf %146, %147 : vector<8x64xf32>
    %149 = vector.extract_strided_slice %143 {offsets = [0, 64], sizes = [8, 64], strides = [1, 1]} : vector<8x256xf32> to vector<8x64xf32>
    %cst_48 = arith.constant 5.000000e-01 : f32
    %150 = vector.broadcast %cst_48 : f32 to vector<8x64xf32>
    %151 = arith.mulf %150, %149 : vector<8x64xf32>
    %cst_49 = arith.constant 5.000000e-01 : f32
    %152 = vector.broadcast %cst_49 : f32 to vector<8x64xf32>
    %153 = arith.addf %151, %152 : vector<8x64xf32>
    %154 = vector.extract_strided_slice %143 {offsets = [0, 128], sizes = [8, 64], strides = [1, 1]} : vector<8x256xf32> to vector<8x64xf32>
    %155 = vector.extract_strided_slice %143 {offsets = [0, 192], sizes = [8, 64], strides = [1, 1]} : vector<8x256xf32> to vector<8x64xf32>
    %cst_50 = arith.constant 5.000000e-01 : f32
    %156 = vector.broadcast %cst_50 : f32 to vector<8x64xf32>
    %157 = arith.mulf %156, %155 : vector<8x64xf32>
    %cst_51 = arith.constant 5.000000e-01 : f32
    %158 = vector.broadcast %cst_51 : f32 to vector<8x64xf32>
    %159 = arith.addf %157, %158 : vector<8x64xf32>
    %160 = arith.mulf %153, %111 : vector<8x64xf32>
    %161 = arith.mulf %148, %154 : vector<8x64xf32>
    %162 = arith.addf %160, %161 : vector<8x64xf32>
    %163 = math.tanh %162 : vector<8x64xf32>
    %164 = arith.mulf %159, %163 : vector<8x64xf32>
    %165 = tpu.concatenate %164, %138 in 1 : vector<8x64xf32>, vector<8x64xf32> -> vector<8x128xf32>
    %cst_52 = arith.constant dense<0.000000e+00> : vector<8x256xf32>
    %166 = tpu.matmul %165, %21, %cst_52 {dimension_numbers = #tpu.dot_dimension_numbers<[1], [0], [0], [1], [0, 0, 1, 1], [], []>} : vector<8x128xf32>, vector<128x256xf32>, vector<8x256xf32> -> vector<8x256xf32>
    %167 = arith.addf %166, %35 : vector<8x256xf32>
    %168 = math.tanh %167 : vector<8x256xf32>
    %169 = vector.extract_strided_slice %168 {offsets = [0, 0], sizes = [8, 64], strides = [1, 1]} : vector<8x256xf32> to vector<8x64xf32>
    %cst_53 = arith.constant 5.000000e-01 : f32
    %170 = vector.broadcast %cst_53 : f32 to vector<8x64xf32>
    %171 = arith.mulf %170, %169 : vector<8x64xf32>
    %cst_54 = arith.constant 5.000000e-01 : f32
    %172 = vector.broadcast %cst_54 : f32 to vector<8x64xf32>
    %173 = arith.addf %171, %172 : vector<8x64xf32>
    %174 = vector.extract_strided_slice %168 {offsets = [0, 64], sizes = [8, 64], strides = [1, 1]} : vector<8x256xf32> to vector<8x64xf32>
    %cst_55 = arith.constant 5.000000e-01 : f32
    %175 = vector.broadcast %cst_55 : f32 to vector<8x64xf32>
    %176 = arith.mulf %175, %174 : vector<8x64xf32>
    %cst_56 = arith.constant 5.000000e-01 : f32
    %177 = vector.broadcast %cst_56 : f32 to vector<8x64xf32>
    %178 = arith.addf %176, %177 : vector<8x64xf32>
    %179 = vector.extract_strided_slice %168 {offsets = [0, 128], sizes = [8, 64], strides = [1, 1]} : vector<8x256xf32> to vector<8x64xf32>
    %180 = vector.extract_strided_slice %168 {offsets = [0, 192], sizes = [8, 64], strides = [1, 1]} : vector<8x256xf32> to vector<8x64xf32>
    %cst_57 = arith.constant 5.000000e-01 : f32
    %181 = vector.broadcast %cst_57 : f32 to vector<8x64xf32>
    %182 = arith.mulf %181, %180 : vector<8x64xf32>
    %cst_58 = arith.constant 5.000000e-01 : f32
    %183 = vector.broadcast %cst_58 : f32 to vector<8x64xf32>
    %184 = arith.addf %182, %183 : vector<8x64xf32>
    %185 = arith.mulf %178, %136 : vector<8x64xf32>
    %186 = arith.mulf %173, %179 : vector<8x64xf32>
    %187 = arith.addf %185, %186 : vector<8x64xf32>
    %188 = math.tanh %187 : vector<8x64xf32>
    %189 = arith.mulf %184, %188 : vector<8x64xf32>
    %190 = vector.extract_strided_slice %33 {offsets = [3, 0, 0], sizes = [1, 8, 256], strides = [1, 1, 1]} : vector<8x8x256xf32> to vector<1x8x256xf32>
    %191 = vector.shape_cast %190 : vector<1x8x256xf32> to vector<8x256xf32>
    %cst_59 = arith.constant dense<0.000000e+00> : vector<8x256xf32>
    %192 = tpu.matmul %164, %16, %cst_59 {dimension_numbers = #tpu.dot_dimension_numbers<[1], [0], [0], [1], [0, 0, 1, 1], [], []>} : vector<8x64xf32>, vector<64x256xf32>, vector<8x256xf32> -> vector<8x256xf32>
    %193 = arith.addf %191, %192 : vector<8x256xf32>
    %194 = math.tanh %193 : vector<8x256xf32>
    %195 = vector.extract_strided_slice %194 {offsets = [0, 0], sizes = [8, 64], strides = [1, 1]} : vector<8x256xf32> to vector<8x64xf32>
    %cst_60 = arith.constant 5.000000e-01 : f32
    %196 = vector.broadcast %cst_60 : f32 to vector<8x64xf32>
    %197 = arith.mulf %196, %195 : vector<8x64xf32>
    %cst_61 = arith.constant 5.000000e-01 : f32
    %198 = vector.broadcast %cst_61 : f32 to vector<8x64xf32>
    %199 = arith.addf %197, %198 : vector<8x64xf32>
    %200 = vector.extract_strided_slice %194 {offsets = [0, 64], sizes = [8, 64], strides = [1, 1]} : vector<8x256xf32> to vector<8x64xf32>
    %cst_62 = arith.constant 5.000000e-01 : f32
    %201 = vector.broadcast %cst_62 : f32 to vector<8x64xf32>
    %202 = arith.mulf %201, %200 : vector<8x64xf32>
    %cst_63 = arith.constant 5.000000e-01 : f32
    %203 = vector.broadcast %cst_63 : f32 to vector<8x64xf32>
    %204 = arith.addf %202, %203 : vector<8x64xf32>
    %205 = vector.extract_strided_slice %194 {offsets = [0, 128], sizes = [8, 64], strides = [1, 1]} : vector<8x256xf32> to vector<8x64xf32>
    %206 = vector.extract_strided_slice %194 {offsets = [0, 192], sizes = [8, 64], strides = [1, 1]} : vector<8x256xf32> to vector<8x64xf32>
    %cst_64 = arith.constant 5.000000e-01 : f32
    %207 = vector.broadcast %cst_64 : f32 to vector<8x64xf32>
    %208 = arith.mulf %207, %206 : vector<8x64xf32>
    %cst_65 = arith.constant 5.000000e-01 : f32
    %209 = vector.broadcast %cst_65 : f32 to vector<8x64xf32>
    %210 = arith.addf %208, %209 : vector<8x64xf32>
    %211 = arith.mulf %204, %162 : vector<8x64xf32>
    %212 = arith.mulf %199, %205 : vector<8x64xf32>
    %213 = arith.addf %211, %212 : vector<8x64xf32>
    %214 = math.tanh %213 : vector<8x64xf32>
    %215 = arith.mulf %210, %214 : vector<8x64xf32>
    %216 = tpu.concatenate %215, %189 in 1 : vector<8x64xf32>, vector<8x64xf32> -> vector<8x128xf32>
    %cst_66 = arith.constant dense<0.000000e+00> : vector<8x256xf32>
    %217 = tpu.matmul %216, %21, %cst_66 {dimension_numbers = #tpu.dot_dimension_numbers<[1], [0], [0], [1], [0, 0, 1, 1], [], []>} : vector<8x128xf32>, vector<128x256xf32>, vector<8x256xf32> -> vector<8x256xf32>
    %218 = arith.addf %217, %35 : vector<8x256xf32>
    %219 = math.tanh %218 : vector<8x256xf32>
    %220 = vector.extract_strided_slice %219 {offsets = [0, 0], sizes = [8, 64], strides = [1, 1]} : vector<8x256xf32> to vector<8x64xf32>
    %cst_67 = arith.constant 5.000000e-01 : f32
    %221 = vector.broadcast %cst_67 : f32 to vector<8x64xf32>
    %222 = arith.mulf %221, %220 : vector<8x64xf32>
    %cst_68 = arith.constant 5.000000e-01 : f32
    %223 = vector.broadcast %cst_68 : f32 to vector<8x64xf32>
    %224 = arith.addf %222, %223 : vector<8x64xf32>
    %225 = vector.extract_strided_slice %219 {offsets = [0, 64], sizes = [8, 64], strides = [1, 1]} : vector<8x256xf32> to vector<8x64xf32>
    %cst_69 = arith.constant 5.000000e-01 : f32
    %226 = vector.broadcast %cst_69 : f32 to vector<8x64xf32>
    %227 = arith.mulf %226, %225 : vector<8x64xf32>
    %cst_70 = arith.constant 5.000000e-01 : f32
    %228 = vector.broadcast %cst_70 : f32 to vector<8x64xf32>
    %229 = arith.addf %227, %228 : vector<8x64xf32>
    %230 = vector.extract_strided_slice %219 {offsets = [0, 128], sizes = [8, 64], strides = [1, 1]} : vector<8x256xf32> to vector<8x64xf32>
    %231 = vector.extract_strided_slice %219 {offsets = [0, 192], sizes = [8, 64], strides = [1, 1]} : vector<8x256xf32> to vector<8x64xf32>
    %cst_71 = arith.constant 5.000000e-01 : f32
    %232 = vector.broadcast %cst_71 : f32 to vector<8x64xf32>
    %233 = arith.mulf %232, %231 : vector<8x64xf32>
    %cst_72 = arith.constant 5.000000e-01 : f32
    %234 = vector.broadcast %cst_72 : f32 to vector<8x64xf32>
    %235 = arith.addf %233, %234 : vector<8x64xf32>
    %236 = arith.mulf %229, %187 : vector<8x64xf32>
    %237 = arith.mulf %224, %230 : vector<8x64xf32>
    %238 = arith.addf %236, %237 : vector<8x64xf32>
    %239 = math.tanh %238 : vector<8x64xf32>
    %240 = arith.mulf %235, %239 : vector<8x64xf32>
    %241 = vector.extract_strided_slice %33 {offsets = [4, 0, 0], sizes = [1, 8, 256], strides = [1, 1, 1]} : vector<8x8x256xf32> to vector<1x8x256xf32>
    %242 = vector.shape_cast %241 : vector<1x8x256xf32> to vector<8x256xf32>
    %cst_73 = arith.constant dense<0.000000e+00> : vector<8x256xf32>
    %243 = tpu.matmul %215, %16, %cst_73 {dimension_numbers = #tpu.dot_dimension_numbers<[1], [0], [0], [1], [0, 0, 1, 1], [], []>} : vector<8x64xf32>, vector<64x256xf32>, vector<8x256xf32> -> vector<8x256xf32>
    %244 = arith.addf %242, %243 : vector<8x256xf32>
    %245 = math.tanh %244 : vector<8x256xf32>
    %246 = vector.extract_strided_slice %245 {offsets = [0, 0], sizes = [8, 64], strides = [1, 1]} : vector<8x256xf32> to vector<8x64xf32>
    %cst_74 = arith.constant 5.000000e-01 : f32
    %247 = vector.broadcast %cst_74 : f32 to vector<8x64xf32>
    %248 = arith.mulf %247, %246 : vector<8x64xf32>
    %cst_75 = arith.constant 5.000000e-01 : f32
    %249 = vector.broadcast %cst_75 : f32 to vector<8x64xf32>
    %250 = arith.addf %248, %249 : vector<8x64xf32>
    %251 = vector.extract_strided_slice %245 {offsets = [0, 64], sizes = [8, 64], strides = [1, 1]} : vector<8x256xf32> to vector<8x64xf32>
    %cst_76 = arith.constant 5.000000e-01 : f32
    %252 = vector.broadcast %cst_76 : f32 to vector<8x64xf32>
    %253 = arith.mulf %252, %251 : vector<8x64xf32>
    %cst_77 = arith.constant 5.000000e-01 : f32
    %254 = vector.broadcast %cst_77 : f32 to vector<8x64xf32>
    %255 = arith.addf %253, %254 : vector<8x64xf32>
    %256 = vector.extract_strided_slice %245 {offsets = [0, 128], sizes = [8, 64], strides = [1, 1]} : vector<8x256xf32> to vector<8x64xf32>
    %257 = vector.extract_strided_slice %245 {offsets = [0, 192], sizes = [8, 64], strides = [1, 1]} : vector<8x256xf32> to vector<8x64xf32>
    %cst_78 = arith.constant 5.000000e-01 : f32
    %258 = vector.broadcast %cst_78 : f32 to vector<8x64xf32>
    %259 = arith.mulf %258, %257 : vector<8x64xf32>
    %cst_79 = arith.constant 5.000000e-01 : f32
    %260 = vector.broadcast %cst_79 : f32 to vector<8x64xf32>
    %261 = arith.addf %259, %260 : vector<8x64xf32>
    %262 = arith.mulf %255, %213 : vector<8x64xf32>
    %263 = arith.mulf %250, %256 : vector<8x64xf32>
    %264 = arith.addf %262, %263 : vector<8x64xf32>
    %265 = math.tanh %264 : vector<8x64xf32>
    %266 = arith.mulf %261, %265 : vector<8x64xf32>
    %267 = tpu.concatenate %266, %240 in 1 : vector<8x64xf32>, vector<8x64xf32> -> vector<8x128xf32>
    %cst_80 = arith.constant dense<0.000000e+00> : vector<8x256xf32>
    %268 = tpu.matmul %267, %21, %cst_80 {dimension_numbers = #tpu.dot_dimension_numbers<[1], [0], [0], [1], [0, 0, 1, 1], [], []>} : vector<8x128xf32>, vector<128x256xf32>, vector<8x256xf32> -> vector<8x256xf32>
    %269 = arith.addf %268, %35 : vector<8x256xf32>
    %270 = math.tanh %269 : vector<8x256xf32>
    %271 = vector.extract_strided_slice %270 {offsets = [0, 0], sizes = [8, 64], strides = [1, 1]} : vector<8x256xf32> to vector<8x64xf32>
    %cst_81 = arith.constant 5.000000e-01 : f32
    %272 = vector.broadcast %cst_81 : f32 to vector<8x64xf32>
    %273 = arith.mulf %272, %271 : vector<8x64xf32>
    %cst_82 = arith.constant 5.000000e-01 : f32
    %274 = vector.broadcast %cst_82 : f32 to vector<8x64xf32>
    %275 = arith.addf %273, %274 : vector<8x64xf32>
    %276 = vector.extract_strided_slice %270 {offsets = [0, 64], sizes = [8, 64], strides = [1, 1]} : vector<8x256xf32> to vector<8x64xf32>
    %cst_83 = arith.constant 5.000000e-01 : f32
    %277 = vector.broadcast %cst_83 : f32 to vector<8x64xf32>
    %278 = arith.mulf %277, %276 : vector<8x64xf32>
    %cst_84 = arith.constant 5.000000e-01 : f32
    %279 = vector.broadcast %cst_84 : f32 to vector<8x64xf32>
    %280 = arith.addf %278, %279 : vector<8x64xf32>
    %281 = vector.extract_strided_slice %270 {offsets = [0, 128], sizes = [8, 64], strides = [1, 1]} : vector<8x256xf32> to vector<8x64xf32>
    %282 = vector.extract_strided_slice %270 {offsets = [0, 192], sizes = [8, 64], strides = [1, 1]} : vector<8x256xf32> to vector<8x64xf32>
    %cst_85 = arith.constant 5.000000e-01 : f32
    %283 = vector.broadcast %cst_85 : f32 to vector<8x64xf32>
    %284 = arith.mulf %283, %282 : vector<8x64xf32>
    %cst_86 = arith.constant 5.000000e-01 : f32
    %285 = vector.broadcast %cst_86 : f32 to vector<8x64xf32>
    %286 = arith.addf %284, %285 : vector<8x64xf32>
    %287 = arith.mulf %280, %238 : vector<8x64xf32>
    %288 = arith.mulf %275, %281 : vector<8x64xf32>
    %289 = arith.addf %287, %288 : vector<8x64xf32>
    %290 = math.tanh %289 : vector<8x64xf32>
    %291 = arith.mulf %286, %290 : vector<8x64xf32>
    %292 = vector.extract_strided_slice %33 {offsets = [5, 0, 0], sizes = [1, 8, 256], strides = [1, 1, 1]} : vector<8x8x256xf32> to vector<1x8x256xf32>
    %293 = vector.shape_cast %292 : vector<1x8x256xf32> to vector<8x256xf32>
    %cst_87 = arith.constant dense<0.000000e+00> : vector<8x256xf32>
    %294 = tpu.matmul %266, %16, %cst_87 {dimension_numbers = #tpu.dot_dimension_numbers<[1], [0], [0], [1], [0, 0, 1, 1], [], []>} : vector<8x64xf32>, vector<64x256xf32>, vector<8x256xf32> -> vector<8x256xf32>
    %295 = arith.addf %293, %294 : vector<8x256xf32>
    %296 = math.tanh %295 : vector<8x256xf32>
    %297 = vector.extract_strided_slice %296 {offsets = [0, 0], sizes = [8, 64], strides = [1, 1]} : vector<8x256xf32> to vector<8x64xf32>
    %cst_88 = arith.constant 5.000000e-01 : f32
    %298 = vector.broadcast %cst_88 : f32 to vector<8x64xf32>
    %299 = arith.mulf %298, %297 : vector<8x64xf32>
    %cst_89 = arith.constant 5.000000e-01 : f32
    %300 = vector.broadcast %cst_89 : f32 to vector<8x64xf32>
    %301 = arith.addf %299, %300 : vector<8x64xf32>
    %302 = vector.extract_strided_slice %296 {offsets = [0, 64], sizes = [8, 64], strides = [1, 1]} : vector<8x256xf32> to vector<8x64xf32>
    %cst_90 = arith.constant 5.000000e-01 : f32
    %303 = vector.broadcast %cst_90 : f32 to vector<8x64xf32>
    %304 = arith.mulf %303, %302 : vector<8x64xf32>
    %cst_91 = arith.constant 5.000000e-01 : f32
    %305 = vector.broadcast %cst_91 : f32 to vector<8x64xf32>
    %306 = arith.addf %304, %305 : vector<8x64xf32>
    %307 = vector.extract_strided_slice %296 {offsets = [0, 128], sizes = [8, 64], strides = [1, 1]} : vector<8x256xf32> to vector<8x64xf32>
    %308 = vector.extract_strided_slice %296 {offsets = [0, 192], sizes = [8, 64], strides = [1, 1]} : vector<8x256xf32> to vector<8x64xf32>
    %cst_92 = arith.constant 5.000000e-01 : f32
    %309 = vector.broadcast %cst_92 : f32 to vector<8x64xf32>
    %310 = arith.mulf %309, %308 : vector<8x64xf32>
    %cst_93 = arith.constant 5.000000e-01 : f32
    %311 = vector.broadcast %cst_93 : f32 to vector<8x64xf32>
    %312 = arith.addf %310, %311 : vector<8x64xf32>
    %313 = arith.mulf %306, %264 : vector<8x64xf32>
    %314 = arith.mulf %301, %307 : vector<8x64xf32>
    %315 = arith.addf %313, %314 : vector<8x64xf32>
    %316 = math.tanh %315 : vector<8x64xf32>
    %317 = arith.mulf %312, %316 : vector<8x64xf32>
    %318 = tpu.concatenate %317, %291 in 1 : vector<8x64xf32>, vector<8x64xf32> -> vector<8x128xf32>
    %cst_94 = arith.constant dense<0.000000e+00> : vector<8x256xf32>
    %319 = tpu.matmul %318, %21, %cst_94 {dimension_numbers = #tpu.dot_dimension_numbers<[1], [0], [0], [1], [0, 0, 1, 1], [], []>} : vector<8x128xf32>, vector<128x256xf32>, vector<8x256xf32> -> vector<8x256xf32>
    %320 = arith.addf %319, %35 : vector<8x256xf32>
    %321 = math.tanh %320 : vector<8x256xf32>
    %322 = vector.extract_strided_slice %321 {offsets = [0, 0], sizes = [8, 64], strides = [1, 1]} : vector<8x256xf32> to vector<8x64xf32>
    %cst_95 = arith.constant 5.000000e-01 : f32
    %323 = vector.broadcast %cst_95 : f32 to vector<8x64xf32>
    %324 = arith.mulf %323, %322 : vector<8x64xf32>
    %cst_96 = arith.constant 5.000000e-01 : f32
    %325 = vector.broadcast %cst_96 : f32 to vector<8x64xf32>
    %326 = arith.addf %324, %325 : vector<8x64xf32>
    %327 = vector.extract_strided_slice %321 {offsets = [0, 64], sizes = [8, 64], strides = [1, 1]} : vector<8x256xf32> to vector<8x64xf32>
    %cst_97 = arith.constant 5.000000e-01 : f32
    %328 = vector.broadcast %cst_97 : f32 to vector<8x64xf32>
    %329 = arith.mulf %328, %327 : vector<8x64xf32>
    %cst_98 = arith.constant 5.000000e-01 : f32
    %330 = vector.broadcast %cst_98 : f32 to vector<8x64xf32>
    %331 = arith.addf %329, %330 : vector<8x64xf32>
    %332 = vector.extract_strided_slice %321 {offsets = [0, 128], sizes = [8, 64], strides = [1, 1]} : vector<8x256xf32> to vector<8x64xf32>
    %333 = vector.extract_strided_slice %321 {offsets = [0, 192], sizes = [8, 64], strides = [1, 1]} : vector<8x256xf32> to vector<8x64xf32>
    %cst_99 = arith.constant 5.000000e-01 : f32
    %334 = vector.broadcast %cst_99 : f32 to vector<8x64xf32>
    %335 = arith.mulf %334, %333 : vector<8x64xf32>
    %cst_100 = arith.constant 5.000000e-01 : f32
    %336 = vector.broadcast %cst_100 : f32 to vector<8x64xf32>
    %337 = arith.addf %335, %336 : vector<8x64xf32>
    %338 = arith.mulf %331, %289 : vector<8x64xf32>
    %339 = arith.mulf %326, %332 : vector<8x64xf32>
    %340 = arith.addf %338, %339 : vector<8x64xf32>
    %341 = math.tanh %340 : vector<8x64xf32>
    %342 = arith.mulf %337, %341 : vector<8x64xf32>
    %343 = vector.extract_strided_slice %33 {offsets = [6, 0, 0], sizes = [1, 8, 256], strides = [1, 1, 1]} : vector<8x8x256xf32> to vector<1x8x256xf32>
    %344 = vector.shape_cast %343 : vector<1x8x256xf32> to vector<8x256xf32>
    %cst_101 = arith.constant dense<0.000000e+00> : vector<8x256xf32>
    %345 = tpu.matmul %317, %16, %cst_101 {dimension_numbers = #tpu.dot_dimension_numbers<[1], [0], [0], [1], [0, 0, 1, 1], [], []>} : vector<8x64xf32>, vector<64x256xf32>, vector<8x256xf32> -> vector<8x256xf32>
    %346 = arith.addf %344, %345 : vector<8x256xf32>
    %347 = math.tanh %346 : vector<8x256xf32>
    %348 = vector.extract_strided_slice %347 {offsets = [0, 0], sizes = [8, 64], strides = [1, 1]} : vector<8x256xf32> to vector<8x64xf32>
    %cst_102 = arith.constant 5.000000e-01 : f32
    %349 = vector.broadcast %cst_102 : f32 to vector<8x64xf32>
    %350 = arith.mulf %349, %348 : vector<8x64xf32>
    %cst_103 = arith.constant 5.000000e-01 : f32
    %351 = vector.broadcast %cst_103 : f32 to vector<8x64xf32>
    %352 = arith.addf %350, %351 : vector<8x64xf32>
    %353 = vector.extract_strided_slice %347 {offsets = [0, 64], sizes = [8, 64], strides = [1, 1]} : vector<8x256xf32> to vector<8x64xf32>
    %cst_104 = arith.constant 5.000000e-01 : f32
    %354 = vector.broadcast %cst_104 : f32 to vector<8x64xf32>
    %355 = arith.mulf %354, %353 : vector<8x64xf32>
    %cst_105 = arith.constant 5.000000e-01 : f32
    %356 = vector.broadcast %cst_105 : f32 to vector<8x64xf32>
    %357 = arith.addf %355, %356 : vector<8x64xf32>
    %358 = vector.extract_strided_slice %347 {offsets = [0, 128], sizes = [8, 64], strides = [1, 1]} : vector<8x256xf32> to vector<8x64xf32>
    %359 = vector.extract_strided_slice %347 {offsets = [0, 192], sizes = [8, 64], strides = [1, 1]} : vector<8x256xf32> to vector<8x64xf32>
    %cst_106 = arith.constant 5.000000e-01 : f32
    %360 = vector.broadcast %cst_106 : f32 to vector<8x64xf32>
    %361 = arith.mulf %360, %359 : vector<8x64xf32>
    %cst_107 = arith.constant 5.000000e-01 : f32
    %362 = vector.broadcast %cst_107 : f32 to vector<8x64xf32>
    %363 = arith.addf %361, %362 : vector<8x64xf32>
    %364 = arith.mulf %357, %315 : vector<8x64xf32>
    %365 = arith.mulf %352, %358 : vector<8x64xf32>
    %366 = arith.addf %364, %365 : vector<8x64xf32>
    %367 = math.tanh %366 : vector<8x64xf32>
    %368 = arith.mulf %363, %367 : vector<8x64xf32>
    %369 = tpu.concatenate %368, %342 in 1 : vector<8x64xf32>, vector<8x64xf32> -> vector<8x128xf32>
    %cst_108 = arith.constant dense<0.000000e+00> : vector<8x256xf32>
    %370 = tpu.matmul %369, %21, %cst_108 {dimension_numbers = #tpu.dot_dimension_numbers<[1], [0], [0], [1], [0, 0, 1, 1], [], []>} : vector<8x128xf32>, vector<128x256xf32>, vector<8x256xf32> -> vector<8x256xf32>
    %371 = arith.addf %370, %35 : vector<8x256xf32>
    %372 = math.tanh %371 : vector<8x256xf32>
    %373 = vector.extract_strided_slice %372 {offsets = [0, 0], sizes = [8, 64], strides = [1, 1]} : vector<8x256xf32> to vector<8x64xf32>
    %cst_109 = arith.constant 5.000000e-01 : f32
    %374 = vector.broadcast %cst_109 : f32 to vector<8x64xf32>
    %375 = arith.mulf %374, %373 : vector<8x64xf32>
    %cst_110 = arith.constant 5.000000e-01 : f32
    %376 = vector.broadcast %cst_110 : f32 to vector<8x64xf32>
    %377 = arith.addf %375, %376 : vector<8x64xf32>
    %378 = vector.extract_strided_slice %372 {offsets = [0, 64], sizes = [8, 64], strides = [1, 1]} : vector<8x256xf32> to vector<8x64xf32>
    %cst_111 = arith.constant 5.000000e-01 : f32
    %379 = vector.broadcast %cst_111 : f32 to vector<8x64xf32>
    %380 = arith.mulf %379, %378 : vector<8x64xf32>
    %cst_112 = arith.constant 5.000000e-01 : f32
    %381 = vector.broadcast %cst_112 : f32 to vector<8x64xf32>
    %382 = arith.addf %380, %381 : vector<8x64xf32>
    %383 = vector.extract_strided_slice %372 {offsets = [0, 128], sizes = [8, 64], strides = [1, 1]} : vector<8x256xf32> to vector<8x64xf32>
    %384 = vector.extract_strided_slice %372 {offsets = [0, 192], sizes = [8, 64], strides = [1, 1]} : vector<8x256xf32> to vector<8x64xf32>
    %cst_113 = arith.constant 5.000000e-01 : f32
    %385 = vector.broadcast %cst_113 : f32 to vector<8x64xf32>
    %386 = arith.mulf %385, %384 : vector<8x64xf32>
    %cst_114 = arith.constant 5.000000e-01 : f32
    %387 = vector.broadcast %cst_114 : f32 to vector<8x64xf32>
    %388 = arith.addf %386, %387 : vector<8x64xf32>
    %389 = arith.mulf %382, %340 : vector<8x64xf32>
    %390 = arith.mulf %377, %383 : vector<8x64xf32>
    %391 = arith.addf %389, %390 : vector<8x64xf32>
    %392 = math.tanh %391 : vector<8x64xf32>
    %393 = arith.mulf %388, %392 : vector<8x64xf32>
    %394 = vector.extract_strided_slice %33 {offsets = [7, 0, 0], sizes = [1, 8, 256], strides = [1, 1, 1]} : vector<8x8x256xf32> to vector<1x8x256xf32>
    %395 = vector.shape_cast %394 : vector<1x8x256xf32> to vector<8x256xf32>
    %cst_115 = arith.constant dense<0.000000e+00> : vector<8x256xf32>
    %396 = tpu.matmul %368, %16, %cst_115 {dimension_numbers = #tpu.dot_dimension_numbers<[1], [0], [0], [1], [0, 0, 1, 1], [], []>} : vector<8x64xf32>, vector<64x256xf32>, vector<8x256xf32> -> vector<8x256xf32>
    %397 = arith.addf %395, %396 : vector<8x256xf32>
    %398 = math.tanh %397 : vector<8x256xf32>
    %399 = vector.extract_strided_slice %398 {offsets = [0, 0], sizes = [8, 64], strides = [1, 1]} : vector<8x256xf32> to vector<8x64xf32>
    %cst_116 = arith.constant 5.000000e-01 : f32
    %400 = vector.broadcast %cst_116 : f32 to vector<8x64xf32>
    %401 = arith.mulf %400, %399 : vector<8x64xf32>
    %cst_117 = arith.constant 5.000000e-01 : f32
    %402 = vector.broadcast %cst_117 : f32 to vector<8x64xf32>
    %403 = arith.addf %401, %402 : vector<8x64xf32>
    %404 = vector.extract_strided_slice %398 {offsets = [0, 64], sizes = [8, 64], strides = [1, 1]} : vector<8x256xf32> to vector<8x64xf32>
    %cst_118 = arith.constant 5.000000e-01 : f32
    %405 = vector.broadcast %cst_118 : f32 to vector<8x64xf32>
    %406 = arith.mulf %405, %404 : vector<8x64xf32>
    %cst_119 = arith.constant 5.000000e-01 : f32
    %407 = vector.broadcast %cst_119 : f32 to vector<8x64xf32>
    %408 = arith.addf %406, %407 : vector<8x64xf32>
    %409 = vector.extract_strided_slice %398 {offsets = [0, 128], sizes = [8, 64], strides = [1, 1]} : vector<8x256xf32> to vector<8x64xf32>
    %410 = vector.extract_strided_slice %398 {offsets = [0, 192], sizes = [8, 64], strides = [1, 1]} : vector<8x256xf32> to vector<8x64xf32>
    %cst_120 = arith.constant 5.000000e-01 : f32
    %411 = vector.broadcast %cst_120 : f32 to vector<8x64xf32>
    %412 = arith.mulf %411, %410 : vector<8x64xf32>
    %cst_121 = arith.constant 5.000000e-01 : f32
    %413 = vector.broadcast %cst_121 : f32 to vector<8x64xf32>
    %414 = arith.addf %412, %413 : vector<8x64xf32>
    %415 = arith.mulf %408, %366 : vector<8x64xf32>
    %416 = arith.mulf %403, %409 : vector<8x64xf32>
    %417 = arith.addf %415, %416 : vector<8x64xf32>
    %418 = math.tanh %417 : vector<8x64xf32>
    %419 = arith.mulf %414, %418 : vector<8x64xf32>
    %420 = tpu.concatenate %419, %393 in 1 : vector<8x64xf32>, vector<8x64xf32> -> vector<8x128xf32>
    %cst_122 = arith.constant dense<0.000000e+00> : vector<8x256xf32>
    %421 = tpu.matmul %420, %21, %cst_122 {dimension_numbers = #tpu.dot_dimension_numbers<[1], [0], [0], [1], [0, 0, 1, 1], [], []>} : vector<8x128xf32>, vector<128x256xf32>, vector<8x256xf32> -> vector<8x256xf32>
    %422 = arith.addf %421, %35 : vector<8x256xf32>
    %423 = math.tanh %422 : vector<8x256xf32>
    %424 = vector.extract_strided_slice %423 {offsets = [0, 0], sizes = [8, 64], strides = [1, 1]} : vector<8x256xf32> to vector<8x64xf32>
    %cst_123 = arith.constant 5.000000e-01 : f32
    %425 = vector.broadcast %cst_123 : f32 to vector<8x64xf32>
    %426 = arith.mulf %425, %424 : vector<8x64xf32>
    %cst_124 = arith.constant 5.000000e-01 : f32
    %427 = vector.broadcast %cst_124 : f32 to vector<8x64xf32>
    %428 = arith.addf %426, %427 : vector<8x64xf32>
    %429 = vector.extract_strided_slice %423 {offsets = [0, 64], sizes = [8, 64], strides = [1, 1]} : vector<8x256xf32> to vector<8x64xf32>
    %cst_125 = arith.constant 5.000000e-01 : f32
    %430 = vector.broadcast %cst_125 : f32 to vector<8x64xf32>
    %431 = arith.mulf %430, %429 : vector<8x64xf32>
    %cst_126 = arith.constant 5.000000e-01 : f32
    %432 = vector.broadcast %cst_126 : f32 to vector<8x64xf32>
    %433 = arith.addf %431, %432 : vector<8x64xf32>
    %434 = vector.extract_strided_slice %423 {offsets = [0, 128], sizes = [8, 64], strides = [1, 1]} : vector<8x256xf32> to vector<8x64xf32>
    %435 = vector.extract_strided_slice %423 {offsets = [0, 192], sizes = [8, 64], strides = [1, 1]} : vector<8x256xf32> to vector<8x64xf32>
    %cst_127 = arith.constant 5.000000e-01 : f32
    %436 = vector.broadcast %cst_127 : f32 to vector<8x64xf32>
    %437 = arith.mulf %436, %435 : vector<8x64xf32>
    %cst_128 = arith.constant 5.000000e-01 : f32
    %438 = vector.broadcast %cst_128 : f32 to vector<8x64xf32>
    %439 = arith.addf %437, %438 : vector<8x64xf32>
    %440 = arith.mulf %433, %391 : vector<8x64xf32>
    %441 = arith.mulf %428, %434 : vector<8x64xf32>
    %442 = arith.addf %440, %441 : vector<8x64xf32>
    %443 = math.tanh %442 : vector<8x64xf32>
    %444 = arith.mulf %439, %443 : vector<8x64xf32>
    %cst_129 = arith.constant dense<0.000000e+00> : vector<8x3xf32>
    %445 = tpu.matmul %444, %1, %cst_129 {dimension_numbers = #tpu.dot_dimension_numbers<[1], [0], [0], [1], [0, 0, 1, 1], [], []>} : vector<8x64xf32>, vector<64x3xf32>, vector<8x3xf32> -> vector<8x3xf32>
    %446 = vector.broadcast %2 : vector<1x3xf32> to vector<8x3xf32>
    %447 = arith.addf %445, %446 : vector<8x3xf32>
    %c0_130 = arith.constant 0 : index
    %c0_131 = arith.constant 0 : index
    %448 = vector.load %arg9[%c0_130, %c0_131] : memref<8x3xf32, #tpu.memory_space<vmem>>, vector<8x3xf32>
    tpu.vector_store %arg9[%c0_130, %c0_131], %447 {strides = array<i32>} : memref<8x3xf32, #tpu.memory_space<vmem>>, vector<8x3xf32>,
    return
  }
  func.func @transform_0(%arg0: i32) -> (i32, i32) {
    %c0_i32 = arith.constant 0 : i32
    %c0_i32_0 = arith.constant 0 : i32
    return %arg0, %c0_i32 : i32, i32
  }
  func.func @transform_1(%arg0: i32) -> (i32, i32) {
    %c0_i32 = arith.constant 0 : i32
    %c0_i32_0 = arith.constant 0 : i32
    %c0_i32_1 = arith.constant 0 : i32
    return %c0_i32, %c0_i32_0 : i32, i32
  }
  func.func @transform_2(%arg0: i32) -> (i32, i32) {
    %c0_i32 = arith.constant 0 : i32
    %c0_i32_0 = arith.constant 0 : i32
    %c0_i32_1 = arith.constant 0 : i32
    return %c0_i32, %c0_i32_0 : i32, i32
  }
  func.func @transform_3(%arg0: i32) -> (i32, i32) {
    %c0_i32 = arith.constant 0 : i32
    %c0_i32_0 = arith.constant 0 : i32
    %c0_i32_1 = arith.constant 0 : i32
    return %c0_i32, %c0_i32_0 : i32, i32
  }
  func.func @transform_4(%arg0: i32) -> (i32, i32) {
    %c0_i32 = arith.constant 0 : i32
    %c0_i32_0 = arith.constant 0 : i32
    %c0_i32_1 = arith.constant 0 : i32
    return %c0_i32, %c0_i32_0 : i32, i32
  }
  func.func @transform_5(%arg0: i32) -> (i32, i32) {
    %c0_i32 = arith.constant 0 : i32
    %c0_i32_0 = arith.constant 0 : i32
    %c0_i32_1 = arith.constant 0 : i32
    return %c0_i32, %c0_i32_0 : i32, i32
  }
  func.func @transform_6(%arg0: i32) -> (i32, i32) {
    %c0_i32 = arith.constant 0 : i32
    %c0_i32_0 = arith.constant 0 : i32
    %c0_i32_1 = arith.constant 0 : i32
    return %c0_i32, %c0_i32_0 : i32, i32
  }
  func.func @transform_7(%arg0: i32) -> (i32, i32) {
    %c0_i32 = arith.constant 0 : i32
    %c0_i32_0 = arith.constant 0 : i32
    %c0_i32_1 = arith.constant 0 : i32
    return %c0_i32, %c0_i32_0 : i32, i32
  }
  func.func @transform_8(%arg0: i32) -> (i32, i32) {
    %c0_i32 = arith.constant 0 : i32
    %c0_i32_0 = arith.constant 0 : i32
    return %arg0, %c0_i32 : i32, i32
  }
}

</mosaic_0001>

<llo_original>
// kernel: tpu_custom_call.1
$region0: #{tpu_custom_call.1}
  #allocation0 [shape = 'u32[]', space=smem, size = 0x4, offset = 0x4, fixed_abs, tag = 'smem constant byte address 0x4 - core index']
  #allocation1 [shape = 'u32[72,128]{1,0:T(1,128)}', space=vmem, size = 0x9000, scoped, tag = 'internal scratch']
  %s0 = inlined_call_operand.vmem [shape: f32[8,8], index: 0, kind: input, shape index: {}]
  %s1 = inlined_call_operand.vmem [shape: f32[1,256], index: 1, kind: input, shape index: {}]
  %s2 = inlined_call_operand.hbm [shape: f32[64,256], index: 2, kind: input, shape index: {}]
  %s3 = inlined_call_operand.vmem [shape: f32[1,256], index: 3, kind: input, shape index: {}]
  %s4 = inlined_call_operand.hbm [shape: f32[128,256], index: 4, kind: input, shape index: {}]
  %s5 = inlined_call_operand.vmem [shape: f32[1,256], index: 5, kind: input, shape index: {}]
  %s6 = inlined_call_operand.vmem [shape: f32[64,3], index: 6, kind: input, shape index: {}]
  %s7 = inlined_call_operand.vmem [shape: f32[1,3], index: 7, kind: input, shape index: {}]
  %s8 = inlined_call_operand.vmem [shape: f32[8,3], index: 8, kind: output, shape index: {}]
  %s9 = sld [smem:[#allocation0]]
  $region50: #{tpu_custom_call.1} parent=0
    _
  %s11 = ssub.s32 1, %s9
  %s12 = scalar_select 0, %s11, %s9
  $region1: #{tpu_custom_call.1} parent=0
    #allocation2 [shape = 'u8[65536]{0}', space=vmem, size = 0x10000, scoped, tag = 'input window, operand 2, single buffered']
    #allocation3 [shape = 's32[1]{0}', space=sflag, size = 0x4, scoped, tag = 'scoped memory for tpu_custom_call.1']
    #allocation4 [shape = 'u8[131072]{0}', space=vmem, size = 0x20000, scoped, tag = 'input window, operand 4, single buffered']
    #allocation5 [shape = 's32[1]{0}', space=sflag, size = 0x4, scoped, tag = 'scoped memory for tpu_custom_call.1']
    %13 = vsyncpa [#allocation3], 0
    %14 = vsyncpa [#allocation5], 0
    // Predicated region
    $region2: #{tpu_custom_call.1} parent=1 // pred_check
      _
    $region3: #{tpu_custom_call.1} parent=1 // pred_check_branch
      %16 = sbr.rel (0) target = $region5
    $region4: #{tpu_custom_call.1} parent=1 // pred_region
      _
    $region5: #{tpu_custom_call.1} parent=1 // pred_fallthru
      _
    // Predicated region
    $region6: #{tpu_custom_call.1} parent=1 // pred_check
      _
    $region7: #{tpu_custom_call.1} parent=1 // pred_check_branch
      %18 = sbr.rel (0) target = $region9
    $region8: #{tpu_custom_call.1} parent=1 // pred_region
      _
    $region9: #{tpu_custom_call.1} parent=1 // pred_fallthru
      _
    // Predicated region
    $region10: #{tpu_custom_call.1} parent=1 // pred_check
      _
    $region11: #{tpu_custom_call.1} parent=1 // pred_check_branch
      %20 = sbr.rel (0) target = $region13
    $region12: #{tpu_custom_call.1} parent=1 // pred_region
      %22 = vsyncadd [#allocation3], 0
      %s23 = sshll.u32 %s2, 4
      %s24 = int_to_ptr.hbm [resolvable:$true] %s23
      %s25 = sshll.u32 [#allocation2], 4
      %s26 = int_to_ptr.vmem [resolvable:$true] %s25
      %31 = dma.hbm_to_vmem [thread:$0]  %s24, 2048, %s26, [#allocation3], 256, 256, 16
    $region13: #{tpu_custom_call.1} parent=1 // pred_fallthru
      _
    // Predicated region
    $region14: #{tpu_custom_call.1} parent=1 // pred_check
      _
    $region15: #{tpu_custom_call.1} parent=1 // pred_check_branch
      %33 = sbr.rel (0) target = $region17
    $region16: #{tpu_custom_call.1} parent=1 // pred_region
      _
    $region17: #{tpu_custom_call.1} parent=1 // pred_fallthru
      _
    // Predicated region
    $region18: #{tpu_custom_call.1} parent=1 // pred_check
      _
    $region19: #{tpu_custom_call.1} parent=1 // pred_check_branch
      %35 = sbr.rel (0) target = $region21
    $region20: #{tpu_custom_call.1} parent=1 // pred_region
      %37 = vsyncadd [#allocation5], 0
      %s38 = sshll.u32 %s4, 4
      %s39 = int_to_ptr.hbm [resolvable:$true] %s38
      %s40 = sshll.u32 [#allocation4], 4
      %s41 = int_to_ptr.vmem [resolvable:$true] %s40
      %46 = dma.hbm_to_vmem [thread:$0]  %s39, 4096, %s41, [#allocation5], 256, 256, 16
    $region21: #{tpu_custom_call.1} parent=1 // pred_fallthru
      _
    // Predicated region
    $region22: #{tpu_custom_call.1} parent=1 // pred_check
      _
    $region23: #{tpu_custom_call.1} parent=1 // pred_check_branch
      %48 = sbr.rel (0) target = $region25
    $region24: #{tpu_custom_call.1} parent=1 // pred_region
      _
    $region25: #{tpu_custom_call.1} parent=1 // pred_fallthru
      _
    // Predicated region
    $region26: #{tpu_custom_call.1} parent=1 // pred_check
      _
    $region27: #{tpu_custom_call.1} parent=1 // pred_check_branch
      %50 = sbr.rel (0) target = $region29
    $region28: #{tpu_custom_call.1} parent=1 // pred_region
      _
    $region29: #{tpu_custom_call.1} parent=1 // pred_fallthru
      _
    // Predicated region
    $region30: #{tpu_custom_call.1} parent=1 // pred_check
      _
    $region31: #{tpu_custom_call.1} parent=1 // pred_check_branch
      %52 = sbr.rel (0) target = $region33
    $region32: #{tpu_custom_call.1} parent=1 // pred_region
      _
    $region33: #{tpu_custom_call.1} parent=1 // pred_fallthru
      _
    // Predicated region
    $region34: #{tpu_custom_call.1} parent=1 // pred_check
      _
    $region35: #{tpu_custom_call.1} parent=1 // pred_check_branch
      %54 = sbr.rel (0) target = $region37
    $region36: #{tpu_custom_call.1} parent=1 // pred_region
      %56 = dma.done [#allocation3], 2048
    $region37: #{tpu_custom_call.1} parent=1 // pred_fallthru
      _
    // Predicated region
    $region38: #{tpu_custom_call.1} parent=1 // pred_check
      _
    $region39: #{tpu_custom_call.1} parent=1 // pred_check_branch
      %58 = sbr.rel (0) target = $region41
    $region40: #{tpu_custom_call.1} parent=1 // pred_region
      %60 = dma.done [#allocation5], 4096
    $region41: #{tpu_custom_call.1} parent=1 // pred_fallthru
      _
    %v61 = vld [vmem:[%s0] sm:$0xff]
    %v62 = vld [vmem:[%s6] sm:$0xff]
    %v63 = vld [vmem:[%s6 + $0x8] sm:$0xff]
    %v64 = vld [vmem:[%s6 + $0x10] sm:$0xff]
    %v65 = vld [vmem:[%s6 + $0x18] sm:$0xff]
    %v66 = vld [vmem:[%s6 + $0x20] sm:$0xff]
    %v67 = vld [vmem:[%s6 + $0x28] sm:$0xff]
    %v68 = vld [vmem:[%s6 + $0x30] sm:$0xff]
    %v69 = vld [vmem:[%s6 + $0x38] sm:$0xff]
    %v70 = vld [vmem:[%s7] sm:$0x1]
    %v71 = vlaneseq
    %v72 = vand.u32 %v71, 127
    %v73 = vadd.s32 %v72, 128
    %vm74 = vcmp.ge.s32.totalorder %v72, 128
    %vm75 = vcmp.ge.s32.totalorder %v73, 128
    %vm76 = vcmp.lt.s32.totalorder %v72, 192
    %vm77 = vcmp.lt.s32.totalorder %v73, 192
    %vm78 = vmand %vm74, %vm76
    %vm79 = vmand %vm75, %vm77
    %v80 = vsel %vm78, 1.0, 0.5
    %v81 = vsel %vm79, 1.0, 0.5
    %v82 = vld [vmem:[%s1] sm:$0x3]
    %v85 = vrot.slane %v81, 7
    %vm86 = vcmask 1040384
    %v87 = vsel %vm86, %v80, %v85
    %v89 = vmul.f32 %v82, %v87
    %v90 = vld [vmem:[#allocation2] sm:$0xff]
    %v91 = vld [vmem:[#allocation2 + $0x8] sm:$0xff]
    %v92 = vld [vmem:[#allocation2 + $0x10] sm:$0xff]
    %v93 = vld [vmem:[#allocation2 + $0x18] sm:$0xff]
    %v94 = vld [vmem:[#allocation2 + $0x20] sm:$0xff]
    %v95 = vld [vmem:[#allocation2 + $0x28] sm:$0xff]
    %v96 = vld [vmem:[#allocation2 + $0x30] sm:$0xff]
    %v97 = vld [vmem:[#allocation2 + $0x38] sm:$0xff]
    %v98 = vld [vmem:[#allocation2 + $0x40] sm:$0xff]
    %v99 = vld [vmem:[#allocation2 + $0x48] sm:$0xff]
    %v100 = vld [vmem:[#allocation2 + $0x50] sm:$0xff]
    %v101 = vld [vmem:[#allocation2 + $0x58] sm:$0xff]
    %v102 = vld [vmem:[#allocation2 + $0x60] sm:$0xff]
    %v103 = vld [vmem:[#allocation2 + $0x68] sm:$0xff]
    %v104 = vld [vmem:[#allocation2 + $0x70] sm:$0xff]
    %v105 = vld [vmem:[#allocation2 + $0x78] sm:$0xff]
    %v106 = vmul.f32 %v90, %v80
    %v107 = vmul.f32 %v91, %v81
    %v108 = vmul.f32 %v92, %v80
    %v109 = vmul.f32 %v93, %v81
    %v110 = vmul.f32 %v94, %v80
    %v111 = vmul.f32 %v95, %v81
    %v112 = vmul.f32 %v96, %v80
    %v113 = vmul.f32 %v97, %v81
    %v114 = vmul.f32 %v98, %v80
    %v115 = vmul.f32 %v99, %v81
    %v116 = vmul.f32 %v100, %v80
    %v117 = vmul.f32 %v101, %v81
    %v118 = vmul.f32 %v102, %v80
    %v119 = vmul.f32 %v103, %v81
    %v120 = vmul.f32 %v104, %v80
    %v121 = vmul.f32 %v105, %v81
    %v122 = vld [vmem:[%s3] sm:$0x3]
    %v123 = vmul.f32 %v122, %v87
    %v124 = vld [vmem:[#allocation4] sm:$0xff]
    %v125 = vld [vmem:[#allocation4 + $0x8] sm:$0xff]
    %v126 = vld [vmem:[#allocation4 + $0x10] sm:$0xff]
    %v127 = vld [vmem:[#allocation4 + $0x18] sm:$0xff]
    %v128 = vld [vmem:[#allocation4 + $0x20] sm:$0xff]
    %v129 = vld [vmem:[#allocation4 + $0x28] sm:$0xff]
    %v130 = vld [vmem:[#allocation4 + $0x30] sm:$0xff]
    %v131 = vld [vmem:[#allocation4 + $0x38] sm:$0xff]
    %v132 = vld [vmem:[#allocation4 + $0x40] sm:$0xff]
    %v133 = vld [vmem:[#allocation4 + $0x48] sm:$0xff]
    %v134 = vld [vmem:[#allocation4 + $0x50] sm:$0xff]
    %v135 = vld [vmem:[#allocation4 + $0x58] sm:$0xff]
    %v136 = vld [vmem:[#allocation4 + $0x60] sm:$0xff]
    %v137 = vld [vmem:[#allocation4 + $0x68] sm:$0xff]
    %v138 = vld [vmem:[#allocation4 + $0x70] sm:$0xff]
    %v139 = vld [vmem:[#allocation4 + $0x78] sm:$0xff]
    %v140 = vld [vmem:[#allocation4 + $0x80] sm:$0xff]
    %v141 = vld [vmem:[#allocation4 + $0x88] sm:$0xff]
    %v142 = vld [vmem:[#allocation4 + $0x90] sm:$0xff]
    %v143 = vld [vmem:[#allocation4 + $0x98] sm:$0xff]
    %v144 = vld [vmem:[#allocation4 + $0xa0] sm:$0xff]
    %v145 = vld [vmem:[#allocation4 + $0xa8] sm:$0xff]
    %v146 = vld [vmem:[#allocation4 + $0xb0] sm:$0xff]
    %v147 = vld [vmem:[#allocation4 + $0xb8] sm:$0xff]
    %v148 = vld [vmem:[#allocation4 + $0xc0] sm:$0xff]
    %v149 = vld [vmem:[#allocation4 + $0xc8] sm:$0xff]
    %v150 = vld [vmem:[#allocation4 + $0xd0] sm:$0xff]
    %v151 = vld [vmem:[#allocation4 + $0xd8] sm:$0xff]
    %v152 = vld [vmem:[#allocation4 + $0xe0] sm:$0xff]
    %v153 = vld [vmem:[#allocation4 + $0xe8] sm:$0xff]
    %v154 = vld [vmem:[#allocation4 + $0xf0] sm:$0xff]
    %v155 = vld [vmem:[#allocation4 + $0xf8] sm:$0xff]
    %v156 = vmul.f32 %v124, %v80
    %v157 = vmul.f32 %v125, %v81
    %v158 = vmul.f32 %v126, %v80
    %v159 = vmul.f32 %v127, %v81
    %v160 = vmul.f32 %v128, %v80
    %v161 = vmul.f32 %v129, %v81
    %v162 = vmul.f32 %v130, %v80
    %v163 = vmul.f32 %v131, %v81
    %v164 = vmul.f32 %v132, %v80
    %v165 = vmul.f32 %v133, %v81
    %v166 = vmul.f32 %v134, %v80
    %v167 = vmul.f32 %v135, %v81
    %v168 = vmul.f32 %v136, %v80
    %v169 = vmul.f32 %v137, %v81
    %v170 = vmul.f32 %v138, %v80
    %v171 = vmul.f32 %v139, %v81
    %v172 = vmul.f32 %v140, %v80
    %v173 = vmul.f32 %v141, %v81
    %v174 = vmul.f32 %v142, %v80
    %v175 = vmul.f32 %v143, %v81
    %v176 = vmul.f32 %v144, %v80
    %v177 = vmul.f32 %v145, %v81
    %v178 = vmul.f32 %v146, %v80
    %v179 = vmul.f32 %v147, %v81
    %v180 = vmul.f32 %v148, %v80
    %v181 = vmul.f32 %v149, %v81
    %v182 = vmul.f32 %v150, %v80
    %v183 = vmul.f32 %v151, %v81
    %v184 = vmul.f32 %v152, %v80
    %v185 = vmul.f32 %v153, %v81
    %v186 = vmul.f32 %v154, %v80
    %v187 = vmul.f32 %v155, %v81
    %v188 = vld [vmem:[%s5] sm:$0x3]
    %v189 = vmul.f32 %v188, %v87
    %190 = vxpose.xlu0.b32.start [1/16] %v61, 128
    %191 = vxpose.xlu0.b32.cont [2/16] 0.0, 128
    %192 = vxpose.xlu0.b32.cont [3/16] 0.0, 128
    %193 = vxpose.xlu0.b32.cont [4/16] 0.0, 128
    %194 = vxpose.xlu0.b32.cont [5/16] 0.0, 128
    %195 = vxpose.xlu0.b32.cont [6/16] 0.0, 128
    %196 = vxpose.xlu0.b32.cont [7/16] 0.0, 128
    %197 = vxpose.xlu0.b32.cont [8/16] 0.0, 128
    %198 = vxpose.xlu0.b32.cont [9/16] 0.0, 128
    %199 = vxpose.xlu0.b32.cont [10/16] 0.0, 128
    %200 = vxpose.xlu0.b32.cont [11/16] 0.0, 128
    %201 = vxpose.xlu0.b32.cont [12/16] 0.0, 128
    %202 = vxpose.xlu0.b32.cont [13/16] 0.0, 128
    %203 = vxpose.xlu0.b32.cont [14/16] 0.0, 128
    %204 = vxpose.xlu0.b32.cont [15/16] 0.0, 128
    %205 = vxpose.xlu0.b32.end [16/16] 0.0, 128
    %v206 = vpop.trf.xlu0
    %v207 = vpop.trf.xlu0
    %v208 = vpop.trf.xlu0
    %v209 = vpop.trf.xlu0
    %v210 = vpop.trf.xlu0
    %v211 = vpop.trf.xlu0
    %v212 = vpop.trf.xlu0
    %v213 = vpop.trf.xlu0
    %v214 = vpop.trf.xlu0
    %v215 = vpop.trf.xlu0
    %v216 = vpop.trf.xlu0
    %v217 = vpop.trf.xlu0
    %v218 = vpop.trf.xlu0
    %v219 = vpop.trf.xlu0
    %v220 = vpop.trf.xlu0
    %v221 = vpop.trf.xlu0
    %v222 = vperm.slane %v206, 0
    %v223 = vlaneseq
    %v224 = vshrl.u32 %v223, 7
    %226 = vset.pattern.permute.xlu0 %v224
    %227 = vperm.xlu0 %226, %v222
    %v228 = vpop.permute.xlu0 %227
    %v229 = vperm.slane %v206, 1
    %v230 = vlaneseq
    %v231 = vshrl.u32 %v230, 7
    %233 = vset.pattern.permute.xlu0 %v231
    %234 = vperm.xlu0 %233, %v229
    %v235 = vpop.permute.xlu0 %234
    %v236 = vperm.slane %v206, 2
    %v237 = vlaneseq
    %v238 = vshrl.u32 %v237, 7
    %240 = vset.pattern.permute.xlu0 %v238
    %241 = vperm.xlu0 %240, %v236
    %v242 = vpop.permute.xlu0 %241
    %v243 = vperm.slane %v206, 3
    %v244 = vlaneseq
    %v245 = vshrl.u32 %v244, 7
    %247 = vset.pattern.permute.xlu0 %v245
    %248 = vperm.xlu0 %247, %v243
    %v249 = vpop.permute.xlu0 %248
    %v250 = vperm.slane %v206, 4
    %v251 = vlaneseq
    %v252 = vshrl.u32 %v251, 7
    %254 = vset.pattern.permute.xlu0 %v252
    %255 = vperm.xlu0 %254, %v250
    %v256 = vpop.permute.xlu0 %255
    %v257 = vperm.slane %v206, 5
    %v258 = vlaneseq
    %v259 = vshrl.u32 %v258, 7
    %261 = vset.pattern.permute.xlu0 %v259
    %262 = vperm.xlu0 %261, %v257
    %v263 = vpop.permute.xlu0 %262
    %v264 = vperm.slane %v206, 6
    %v265 = vlaneseq
    %v266 = vshrl.u32 %v265, 7
    %268 = vset.pattern.permute.xlu0 %v266
    %269 = vperm.xlu0 %268, %v264
    %v270 = vpop.permute.xlu0 %269
    %v271 = vperm.slane %v206, 7
    %v272 = vlaneseq
    %v273 = vshrl.u32 %v272, 7
    %275 = vset.pattern.permute.xlu0 %v273
    %276 = vperm.xlu0 %275, %v271
    %v277 = vpop.permute.xlu0 %276
    %v279 = vperm.slane %v89, 0
    %v280 = vperm.slane %v89, 1
    %v283 = vmul.f32 %v228, %v279
    %v284 = vmul.f32 %v228, %v280
    %v285 = vmul.f32 %v235, %v279
    %v286 = vmul.f32 %v235, %v280
    %v287 = vmul.f32 %v242, %v279
    %v288 = vmul.f32 %v242, %v280
    %v289 = vmul.f32 %v249, %v279
    %v290 = vmul.f32 %v249, %v280
    %v291 = vmul.f32 %v256, %v279
    %v292 = vmul.f32 %v256, %v280
    %v293 = vmul.f32 %v263, %v279
    %v294 = vmul.f32 %v263, %v280
    %v295 = vmul.f32 %v270, %v279
    %v296 = vmul.f32 %v270, %v280
    %v297 = vmul.f32 %v277, %v279
    %v298 = vmul.f32 %v277, %v280
    %v300 = vperm.slane %v123, 0
    %v301 = vperm.slane %v123, 1
    %v304 = vadd.f32 %v283, %v300
    %v305 = vadd.f32 %v284, %v301
    %v306 = vadd.f32 %v285, %v300
    %v307 = vadd.f32 %v286, %v301
    %v308 = vadd.f32 %v287, %v300
    %v309 = vadd.f32 %v288, %v301
    %v310 = vadd.f32 %v289, %v300
    %v311 = vadd.f32 %v290, %v301
    %v312 = vadd.f32 %v291, %v300
    %v313 = vadd.f32 %v292, %v301
    %v314 = vadd.f32 %v293, %v300
    %v315 = vadd.f32 %v294, %v301
    %v316 = vadd.f32 %v295, %v300
    %v317 = vadd.f32 %v296, %v301
    %v318 = vadd.f32 %v297, %v300
    %v319 = vadd.f32 %v298, %v301
    %v321 = vperm.slane %v189, 0
    %v322 = vperm.slane %v189, 1
    %vm325 = vcmask 523264
    %v327 = vsel %vm325, 0.0, 0
    %329 = vmatpush.msra.mxu0 0.0
    %330 = vmatpush.msra.mxu0 0.0
    %331 = vmatpush.msra.mxu0 0.0
    %332 = vmatpush.msra.mxu0 0.0
    %333 = vmatpush.msra.mxu0 0.0
    %334 = vmatpush.msra.mxu0 0.0
    %335 = vmatpush.msra.mxu0 0.0
    %336 = vmatpush.msra.mxu0 0.0
    %337 = vmatpush.msra.mxu0 %v120
    %338 = vmatpush.msra.mxu0 %v118
    %339 = vmatpush.msra.mxu0 %v116
    %340 = vmatpush.msra.mxu0 %v114
    %341 = vmatpush.msra.mxu0 %v112
    %342 = vmatpush.msra.mxu0 %v110
    %343 = vmatpush.msra.mxu0 %v108
    %344 = vmatpush.msra.mxu0 %v106
    %345 = vmatmul.f32.gmra.mxu0 %v327
    %v346 = vpop.f32.mrf.mxu0
    %v347 = vadd.f32 0.0, %v346
    %348 = vdwg.mxu0
    %349 = vmatpush.msra.mxu0 0.0
    %350 = vmatpush.msra.mxu0 0.0
    %351 = vmatpush.msra.mxu0 0.0
    %352 = vmatpush.msra.mxu0 0.0
    %353 = vmatpush.msra.mxu0 0.0
    %354 = vmatpush.msra.mxu0 0.0
    %355 = vmatpush.msra.mxu0 0.0
    %356 = vmatpush.msra.mxu0 0.0
    %357 = vmatpush.msra.mxu0 %v121
    %358 = vmatpush.msra.mxu0 %v119
    %359 = vmatpush.msra.mxu0 %v117
    %360 = vmatpush.msra.mxu0 %v115
    %361 = vmatpush.msra.mxu0 %v113
    %362 = vmatpush.msra.mxu0 %v111
    %363 = vmatpush.msra.mxu0 %v109
    %364 = vmatpush.msra.mxu0 %v107
    %365 = vmatmul.f32.gmra.mxu0 %v327
    %v366 = vpop.f32.mrf.mxu0
    %v367 = vadd.f32 0.0, %v366
    %368 = vdwg.mxu0
    %v369 = vadd.f32 %v304, %v347
    %v370 = vadd.f32 %v305, %v367
    %v371 = vtanh.pop %v369
    %v372 = vtanh.pop %v370
    %v373 = vmul.f32 %v371, 0.5
    %v374 = vadd.f32 %v373, 0.5
    %v375 = vmul.f32 %v372, 0.5
    %v376 = vadd.f32 %v375, 0.5
    %v377 = vmul.f32 %v374, 0.0
    %v378 = vmul.f32 %v374, %v372
    %380 = vrot.lane.b32.xlu0 %v378, 64
    %v381 = vpop.permute.xlu0 %380
    %v383 = vadd.f32 %v377, %v381
    %v384 = vtanh.pop %v383
    %v385 = vmul.f32 %v376, %v384
    %387 = vrot.lane.b32.xlu0 %v385, 64
    %v388 = vpop.permute.xlu0 %387
    %v390 = vsel %vm325, %v388, 0.0
    %391 = vmatpush.msra.mxu0 %v186
    %392 = vmatpush.msra.mxu0 %v184
    %393 = vmatpush.msra.mxu0 %v182
    %394 = vmatpush.msra.mxu0 %v180
    %395 = vmatpush.msra.mxu0 %v178
    %396 = vmatpush.msra.mxu0 %v176
    %397 = vmatpush.msra.mxu0 %v174
    %398 = vmatpush.msra.mxu0 %v172
    %399 = vmatpush.msra.mxu0 %v170
    %400 = vmatpush.msra.mxu0 %v168
    %401 = vmatpush.msra.mxu0 %v166
    %402 = vmatpush.msra.mxu0 %v164
    %403 = vmatpush.msra.mxu0 %v162
    %404 = vmatpush.msra.mxu0 %v160
    %405 = vmatpush.msra.mxu0 %v158
    %406 = vmatpush.msra.mxu0 %v156
    %407 = vmatmul.f32.gmra.mxu0 %v390
    %v408 = vpop.f32.mrf.mxu0
    %v409 = vadd.f32 %v321, %v408
    %410 = vdwg.mxu0
    %411 = vmatpush.msra.mxu0 %v187
    %412 = vmatpush.msra.mxu0 %v185
    %413 = vmatpush.msra.mxu0 %v183
    %414 = vmatpush.msra.mxu0 %v181
    %415 = vmatpush.msra.mxu0 %v179
    %416 = vmatpush.msra.mxu0 %v177
    %417 = vmatpush.msra.mxu0 %v175
    %418 = vmatpush.msra.mxu0 %v173
    %419 = vmatpush.msra.mxu0 %v171
    %420 = vmatpush.msra.mxu0 %v169
    %421 = vmatpush.msra.mxu0 %v167
    %422 = vmatpush.msra.mxu0 %v165
    %423 = vmatpush.msra.mxu0 %v163
    %424 = vmatpush.msra.mxu0 %v161
    %425 = vmatpush.msra.mxu0 %v159
    %426 = vmatpush.msra.mxu0 %v157
    %427 = vmatmul.f32.gmra.mxu0 %v390
    %v428 = vpop.f32.mrf.mxu0
    %v429 = vadd.f32 %v322, %v428
    %430 = vdwg.mxu0
    %v431 = vtanh.pop %v409
    %v432 = vtanh.pop %v429
    %v433 = vmul.f32 %v431, 0.5
    %v434 = vadd.f32 %v433, 0.5
    %v435 = vmul.f32 %v432, 0.5
    %v436 = vadd.f32 %v435, 0.5
    %v437 = vmul.f32 %v434, 0.0
    %v438 = vmul.f32 %v434, %v432
    %440 = vrot.lane.b32.xlu0 %v438, 64
    %v441 = vpop.permute.xlu0 %440
    %v443 = vadd.f32 %v437, %v441
    %v444 = vtanh.pop %v443
    %v445 = vmul.f32 %v436, %v444
    %v446 = vsel %vm325, %v388, 0
    %448 = vmatpush.msra.mxu0 0.0
    %449 = vmatpush.msra.mxu0 0.0
    %450 = vmatpush.msra.mxu0 0.0
    %451 = vmatpush.msra.mxu0 0.0
    %452 = vmatpush.msra.mxu0 0.0
    %453 = vmatpush.msra.mxu0 0.0
    %454 = vmatpush.msra.mxu0 0.0
    %455 = vmatpush.msra.mxu0 0.0
    %456 = vmatpush.msra.mxu0 %v120
    %457 = vmatpush.msra.mxu0 %v118
    %458 = vmatpush.msra.mxu0 %v116
    %459 = vmatpush.msra.mxu0 %v114
    %460 = vmatpush.msra.mxu0 %v112
    %461 = vmatpush.msra.mxu0 %v110
    %462 = vmatpush.msra.mxu0 %v108
    %463 = vmatpush.msra.mxu0 %v106
    %464 = vmatmul.f32.gmra.mxu0 %v446
    %v465 = vpop.f32.mrf.mxu0
    %v466 = vadd.f32 0.0, %v465
    %467 = vdwg.mxu0
    %468 = vmatpush.msra.mxu0 0.0
    %469 = vmatpush.msra.mxu0 0.0
    %470 = vmatpush.msra.mxu0 0.0
    %471 = vmatpush.msra.mxu0 0.0
    %472 = vmatpush.msra.mxu0 0.0
    %473 = vmatpush.msra.mxu0 0.0
    %474 = vmatpush.msra.mxu0 0.0
    %475 = vmatpush.msra.mxu0 0.0
    %476 = vmatpush.msra.mxu0 %v121
    %477 = vmatpush.msra.mxu0 %v119
    %478 = vmatpush.msra.mxu0 %v117
    %479 = vmatpush.msra.mxu0 %v115
    %480 = vmatpush.msra.mxu0 %v113
    %481 = vmatpush.msra.mxu0 %v111
    %482 = vmatpush.msra.mxu0 %v109
    %483 = vmatpush.msra.mxu0 %v107
    %484 = vmatmul.f32.gmra.mxu0 %v446
    %v485 = vpop.f32.mrf.mxu0
    %v486 = vadd.f32 0.0, %v485
    %487 = vdwg.mxu0
    %v488 = vadd.f32 %v306, %v466
    %v489 = vadd.f32 %v307, %v486
    %v490 = vtanh.pop %v488
    %v491 = vtanh.pop %v489
    %v492 = vmul.f32 %v490, 0.5
    %v493 = vadd.f32 %v492, 0.5
    %v494 = vmul.f32 %v491, 0.5
    %v495 = vadd.f32 %v494, 0.5
    %v496 = vmul.f32 %v493, %v383
    %v497 = vmul.f32 %v493, %v491
    %499 = vrot.lane.b32.xlu0 %v497, 64
    %v500 = vpop.permute.xlu0 %499
    %v502 = vadd.f32 %v496, %v500
    %v503 = vtanh.pop %v502
    %v504 = vmul.f32 %v495, %v503
    %506 = vrot.lane.b32.xlu0 %v504, 64
    %v507 = vpop.permute.xlu0 %506
    %v509 = vsel %vm325, %v507, %v445
    %510 = vmatpush.msra.mxu0 %v186
    %511 = vmatpush.msra.mxu0 %v184
    %512 = vmatpush.msra.mxu0 %v182
    %513 = vmatpush.msra.mxu0 %v180
    %514 = vmatpush.msra.mxu0 %v178
    %515 = vmatpush.msra.mxu0 %v176
    %516 = vmatpush.msra.mxu0 %v174
    %517 = vmatpush.msra.mxu0 %v172
    %518 = vmatpush.msra.mxu0 %v170
    %519 = vmatpush.msra.mxu0 %v168
    %520 = vmatpush.msra.mxu0 %v166
    %521 = vmatpush.msra.mxu0 %v164
    %522 = vmatpush.msra.mxu0 %v162
    %523 = vmatpush.msra.mxu0 %v160
    %524 = vmatpush.msra.mxu0 %v158
    %525 = vmatpush.msra.mxu0 %v156
    %526 = vmatmul.f32.gmra.mxu0 %v509
    %v527 = vpop.f32.mrf.mxu0
    %v528 = vadd.f32 %v321, %v527
    %529 = vdwg.mxu0
    %530 = vmatpush.msra.mxu0 %v187
    %531 = vmatpush.msra.mxu0 %v185
    %532 = vmatpush.msra.mxu0 %v183
    %533 = vmatpush.msra.mxu0 %v181
    %534 = vmatpush.msra.mxu0 %v179
    %535 = vmatpush.msra.mxu0 %v177
    %536 = vmatpush.msra.mxu0 %v175
    %537 = vmatpush.msra.mxu0 %v173
    %538 = vmatpush.msra.mxu0 %v171
    %539 = vmatpush.msra.mxu0 %v169
    %540 = vmatpush.msra.mxu0 %v167
    %541 = vmatpush.msra.mxu0 %v165
    %542 = vmatpush.msra.mxu0 %v163
    %543 = vmatpush.msra.mxu0 %v161
    %544 = vmatpush.msra.mxu0 %v159
    %545 = vmatpush.msra.mxu0 %v157
    %546 = vmatmul.f32.gmra.mxu0 %v509
    %v547 = vpop.f32.mrf.mxu0
    %v548 = vadd.f32 %v322, %v547
    %549 = vdwg.mxu0
    %v550 = vtanh.pop %v528
    %v551 = vtanh.pop %v548
    %v552 = vmul.f32 %v550, 0.5
    %v553 = vadd.f32 %v552, 0.5
    %v554 = vmul.f32 %v551, 0.5
    %v555 = vadd.f32 %v554, 0.5
    %v556 = vmul.f32 %v553, %v443
    %v557 = vmul.f32 %v553, %v551
    %559 = vrot.lane.b32.xlu0 %v557, 64
    %v560 = vpop.permute.xlu0 %559
    %v562 = vadd.f32 %v556, %v560
    %v563 = vtanh.pop %v562
    %v564 = vmul.f32 %v555, %v563
    %v565 = vsel %vm325, %v507, 0
    %567 = vmatpush.msra.mxu0 0.0
    %568 = vmatpush.msra.mxu0 0.0
    %569 = vmatpush.msra.mxu0 0.0
    %570 = vmatpush.msra.mxu0 0.0
    %571 = vmatpush.msra.mxu0 0.0
    %572 = vmatpush.msra.mxu0 0.0
    %573 = vmatpush.msra.mxu0 0.0
    %574 = vmatpush.msra.mxu0 0.0
    %575 = vmatpush.msra.mxu0 %v120
    %576 = vmatpush.msra.mxu0 %v118
    %577 = vmatpush.msra.mxu0 %v116
    %578 = vmatpush.msra.mxu0 %v114
    %579 = vmatpush.msra.mxu0 %v112
    %580 = vmatpush.msra.mxu0 %v110
    %581 = vmatpush.msra.mxu0 %v108
    %582 = vmatpush.msra.mxu0 %v106
    %583 = vmatmul.f32.gmra.mxu0 %v565
    %v584 = vpop.f32.mrf.mxu0
    %v585 = vadd.f32 0.0, %v584
    %586 = vdwg.mxu0
    %587 = vmatpush.msra.mxu0 0.0
    %588 = vmatpush.msra.mxu0 0.0
    %589 = vmatpush.msra.mxu0 0.0
    %590 = vmatpush.msra.mxu0 0.0
    %591 = vmatpush.msra.mxu0 0.0
    %592 = vmatpush.msra.mxu0 0.0
    %593 = vmatpush.msra.mxu0 0.0
    %594 = vmatpush.msra.mxu0 0.0
    %595 = vmatpush.msra.mxu0 %v121
    %596 = vmatpush.msra.mxu0 %v119
    %597 = vmatpush.msra.mxu0 %v117
    %598 = vmatpush.msra.mxu0 %v115
    %599 = vmatpush.msra.mxu0 %v113
    %600 = vmatpush.msra.mxu0 %v111
    %601 = vmatpush.msra.mxu0 %v109
    %602 = vmatpush.msra.mxu0 %v107
    %603 = vmatmul.f32.gmra.mxu0 %v565
    %v604 = vpop.f32.mrf.mxu0
    %v605 = vadd.f32 0.0, %v604
    %606 = vdwg.mxu0
    %v607 = vadd.f32 %v308, %v585
    %v608 = vadd.f32 %v309, %v605
    %v609 = vtanh.pop %v607
    %v610 = vtanh.pop %v608
    %v611 = vmul.f32 %v609, 0.5
    %v612 = vadd.f32 %v611, 0.5
    %v613 = vmul.f32 %v610, 0.5
    %v614 = vadd.f32 %v613, 0.5
    %v615 = vmul.f32 %v612, %v502
    %v616 = vmul.f32 %v612, %v610
    %618 = vrot.lane.b32.xlu0 %v616, 64
    %v619 = vpop.permute.xlu0 %618
    %v621 = vadd.f32 %v615, %v619
    %v622 = vtanh.pop %v621
    %v623 = vmul.f32 %v614, %v622
    %625 = vrot.lane.b32.xlu0 %v623, 64
    %v626 = vpop.permute.xlu0 %625
    %v628 = vsel %vm325, %v626, %v564
    %629 = vmatpush.msra.mxu0 %v186
    %630 = vmatpush.msra.mxu0 %v184
    %631 = vmatpush.msra.mxu0 %v182
    %632 = vmatpush.msra.mxu0 %v180
    %633 = vmatpush.msra.mxu0 %v178
    %634 = vmatpush.msra.mxu0 %v176
    %635 = vmatpush.msra.mxu0 %v174
    %636 = vmatpush.msra.mxu0 %v172
    %637 = vmatpush.msra.mxu0 %v170
    %638 = vmatpush.msra.mxu0 %v168
    %639 = vmatpush.msra.mxu0 %v166
    %640 = vmatpush.msra.mxu0 %v164
    %641 = vmatpush.msra.mxu0 %v162
    %642 = vmatpush.msra.mxu0 %v160
    %643 = vmatpush.msra.mxu0 %v158
    %644 = vmatpush.msra.mxu0 %v156
    %645 = vmatmul.f32.gmra.mxu0 %v628
    %v646 = vpop.f32.mrf.mxu0
    %v647 = vadd.f32 %v321, %v646
    %648 = vdwg.mxu0
    %649 = vmatpush.msra.mxu0 %v187
    %650 = vmatpush.msra.mxu0 %v185
    %651 = vmatpush.msra.mxu0 %v183
    %652 = vmatpush.msra.mxu0 %v181
    %653 = vmatpush.msra.mxu0 %v179
    %654 = vmatpush.msra.mxu0 %v177
    %655 = vmatpush.msra.mxu0 %v175
    %656 = vmatpush.msra.mxu0 %v173
    %657 = vmatpush.msra.mxu0 %v171
    %658 = vmatpush.msra.mxu0 %v169
    %659 = vmatpush.msra.mxu0 %v167
    %660 = vmatpush.msra.mxu0 %v165
    %661 = vmatpush.msra.mxu0 %v163
    %662 = vmatpush.msra.mxu0 %v161
    %663 = vmatpush.msra.mxu0 %v159
    %664 = vmatpush.msra.mxu0 %v157
    %665 = vmatmul.f32.gmra.mxu0 %v628
    %v666 = vpop.f32.mrf.mxu0
    %v667 = vadd.f32 %v322, %v666
    %668 = vdwg.mxu0
    %v669 = vtanh.pop %v647
    %v670 = vtanh.pop %v667
    %v671 = vmul.f32 %v669, 0.5
    %v672 = vadd.f32 %v671, 0.5
    %v673 = vmul.f32 %v670, 0.5
    %v674 = vadd.f32 %v673, 0.5
    %v675 = vmul.f32 %v672, %v562
    %v676 = vmul.f32 %v672, %v670
    %678 = vrot.lane.b32.xlu0 %v676, 64
    %v679 = vpop.permute.xlu0 %678
    %v681 = vadd.f32 %v675, %v679
    %v682 = vtanh.pop %v681
    %v683 = vmul.f32 %v674, %v682
    %v684 = vsel %vm325, %v626, 0
    %686 = vmatpush.msra.mxu0 0.0
    %687 = vmatpush.msra.mxu0 0.0
    %688 = vmatpush.msra.mxu0 0.0
    %689 = vmatpush.msra.mxu0 0.0
    %690 = vmatpush.msra.mxu0 0.0
    %691 = vmatpush.msra.mxu0 0.0
    %692 = vmatpush.msra.mxu0 0.0
    %693 = vmatpush.msra.mxu0 0.0
    %694 = vmatpush.msra.mxu0 %v120
    %695 = vmatpush.msra.mxu0 %v118
    %696 = vmatpush.msra.mxu0 %v116
    %697 = vmatpush.msra.mxu0 %v114
    %698 = vmatpush.msra.mxu0 %v112
    %699 = vmatpush.msra.mxu0 %v110
    %700 = vmatpush.msra.mxu0 %v108
    %701 = vmatpush.msra.mxu0 %v106
    %702 = vmatmul.f32.gmra.mxu0 %v684
    %v703 = vpop.f32.mrf.mxu0
    %v704 = vadd.f32 0.0, %v703
    %705 = vdwg.mxu0
    %706 = vmatpush.msra.mxu0 0.0
    %707 = vmatpush.msra.mxu0 0.0
    %708 = vmatpush.msra.mxu0 0.0
    %709 = vmatpush.msra.mxu0 0.0
    %710 = vmatpush.msra.mxu0 0.0
    %711 = vmatpush.msra.mxu0 0.0
    %712 = vmatpush.msra.mxu0 0.0
    %713 = vmatpush.msra.mxu0 0.0
    %714 = vmatpush.msra.mxu0 %v121
    %715 = vmatpush.msra.mxu0 %v119
    %716 = vmatpush.msra.mxu0 %v117
    %717 = vmatpush.msra.mxu0 %v115
    %718 = vmatpush.msra.mxu0 %v113
    %719 = vmatpush.msra.mxu0 %v111
    %720 = vmatpush.msra.mxu0 %v109
    %721 = vmatpush.msra.mxu0 %v107
    %722 = vmatmul.f32.gmra.mxu0 %v684
    %v723 = vpop.f32.mrf.mxu0
    %v724 = vadd.f32 0.0, %v723
    %725 = vdwg.mxu0
    %v726 = vadd.f32 %v310, %v704
    %v727 = vadd.f32 %v311, %v724
    %v728 = vtanh.pop %v726
    %v729 = vtanh.pop %v727
    %v730 = vmul.f32 %v728, 0.5
    %v731 = vadd.f32 %v730, 0.5
    %v732 = vmul.f32 %v729, 0.5
    %v733 = vadd.f32 %v732, 0.5
    %v734 = vmul.f32 %v731, %v621
    %v735 = vmul.f32 %v731, %v729
    %737 = vrot.lane.b32.xlu0 %v735, 64
    %v738 = vpop.permute.xlu0 %737
    %v740 = vadd.f32 %v734, %v738
    %v741 = vtanh.pop %v740
    %v742 = vmul.f32 %v733, %v741
    %744 = vrot.lane.b32.xlu0 %v742, 64
    %v745 = vpop.permute.xlu0 %744
    %v747 = vsel %vm325, %v745, %v683
    %748 = vmatpush.msra.mxu0 %v186
    %749 = vmatpush.msra.mxu0 %v184
    %750 = vmatpush.msra.mxu0 %v182
    %751 = vmatpush.msra.mxu0 %v180
    %752 = vmatpush.msra.mxu0 %v178
    %753 = vmatpush.msra.mxu0 %v176
    %754 = vmatpush.msra.mxu0 %v174
    %755 = vmatpush.msra.mxu0 %v172
    %756 = vmatpush.msra.mxu0 %v170
    %757 = vmatpush.msra.mxu0 %v168
    %758 = vmatpush.msra.mxu0 %v166
    %759 = vmatpush.msra.mxu0 %v164
    %760 = vmatpush.msra.mxu0 %v162
    %761 = vmatpush.msra.mxu0 %v160
    %762 = vmatpush.msra.mxu0 %v158
    %763 = vmatpush.msra.mxu0 %v156
    %764 = vmatmul.f32.gmra.mxu0 %v747
    %v765 = vpop.f32.mrf.mxu0
    %v766 = vadd.f32 %v321, %v765
    %767 = vdwg.mxu0
    %768 = vmatpush.msra.mxu0 %v187
    %769 = vmatpush.msra.mxu0 %v185
    %770 = vmatpush.msra.mxu0 %v183
    %771 = vmatpush.msra.mxu0 %v181
    %772 = vmatpush.msra.mxu0 %v179
    %773 = vmatpush.msra.mxu0 %v177
    %774 = vmatpush.msra.mxu0 %v175
    %775 = vmatpush.msra.mxu0 %v173
    %776 = vmatpush.msra.mxu0 %v171
    %777 = vmatpush.msra.mxu0 %v169
    %778 = vmatpush.msra.mxu0 %v167
    %779 = vmatpush.msra.mxu0 %v165
    %780 = vmatpush.msra.mxu0 %v163
    %781 = vmatpush.msra.mxu0 %v161
    %782 = vmatpush.msra.mxu0 %v159
    %783 = vmatpush.msra.mxu0 %v157
    %784 = vmatmul.f32.gmra.mxu0 %v747
    %v785 = vpop.f32.mrf.mxu0
    %v786 = vadd.f32 %v322, %v785
    %787 = vdwg.mxu0
    %v788 = vtanh.pop %v766
    %v789 = vtanh.pop %v786
    %v790 = vmul.f32 %v788, 0.5
    %v791 = vadd.f32 %v790, 0.5
    %v792 = vmul.f32 %v789, 0.5
    %v793 = vadd.f32 %v792, 0.5
    %v794 = vmul.f32 %v791, %v681
    %v795 = vmul.f32 %v791, %v789
    %797 = vrot.lane.b32.xlu0 %v795, 64
    %v798 = vpop.permute.xlu0 %797
    %v800 = vadd.f32 %v794, %v798
    %v801 = vtanh.pop %v800
    %v802 = vmul.f32 %v793, %v801
    %v803 = vsel %vm325, %v745, 0
    %805 = vmatpush.msra.mxu0 0.0
    %806 = vmatpush.msra.mxu0 0.0
    %807 = vmatpush.msra.mxu0 0.0
    %808 = vmatpush.msra.mxu0 0.0
    %809 = vmatpush.msra.mxu0 0.0
    %810 = vmatpush.msra.mxu0 0.0
    %811 = vmatpush.msra.mxu0 0.0
    %812 = vmatpush.msra.mxu0 0.0
    %813 = vmatpush.msra.mxu0 %v120
    %814 = vmatpush.msra.mxu0 %v118
    %815 = vmatpush.msra.mxu0 %v116
    %816 = vmatpush.msra.mxu0 %v114
    %817 = vmatpush.msra.mxu0 %v112
    %818 = vmatpush.msra.mxu0 %v110
    %819 = vmatpush.msra.mxu0 %v108
    %820 = vmatpush.msra.mxu0 %v106
    %821 = vmatmul.f32.gmra.mxu0 %v803
    %v822 = vpop.f32.mrf.mxu0
    %v823 = vadd.f32 0.0, %v822
    %824 = vdwg.mxu0
    %825 = vmatpush.msra.mxu0 0.0
    %826 = vmatpush.msra.mxu0 0.0
    %827 = vmatpush.msra.mxu0 0.0
    %828 = vmatpush.msra.mxu0 0.0
    %829 = vmatpush.msra.mxu0 0.0
    %830 = vmatpush.msra.mxu0 0.0
    %831 = vmatpush.msra.mxu0 0.0
    %832 = vmatpush.msra.mxu0 0.0
    %833 = vmatpush.msra.mxu0 %v121
    %834 = vmatpush.msra.mxu0 %v119
    %835 = vmatpush.msra.mxu0 %v117
    %836 = vmatpush.msra.mxu0 %v115
    %837 = vmatpush.msra.mxu0 %v113
    %838 = vmatpush.msra.mxu0 %v111
    %839 = vmatpush.msra.mxu0 %v109
    %840 = vmatpush.msra.mxu0 %v107
    %841 = vmatmul.f32.gmra.mxu0 %v803
    %v842 = vpop.f32.mrf.mxu0
    %v843 = vadd.f32 0.0, %v842
    %844 = vdwg.mxu0
    %v845 = vadd.f32 %v312, %v823
    %v846 = vadd.f32 %v313, %v843
    %v847 = vtanh.pop %v845
    %v848 = vtanh.pop %v846
    %v849 = vmul.f32 %v847, 0.5
    %v850 = vadd.f32 %v849, 0.5
    %v851 = vmul.f32 %v848, 0.5
    %v852 = vadd.f32 %v851, 0.5
    %v853 = vmul.f32 %v850, %v740
    %v854 = vmul.f32 %v850, %v848
    %856 = vrot.lane.b32.xlu0 %v854, 64
    %v857 = vpop.permute.xlu0 %856
    %v859 = vadd.f32 %v853, %v857
    %v860 = vtanh.pop %v859
    %v861 = vmul.f32 %v852, %v860
    %863 = vrot.lane.b32.xlu0 %v861, 64
    %v864 = vpop.permute.xlu0 %863
    %v866 = vsel %vm325, %v864, %v802
    %867 = vmatpush.msra.mxu0 %v186
    %868 = vmatpush.msra.mxu0 %v184
    %869 = vmatpush.msra.mxu0 %v182
    %870 = vmatpush.msra.mxu0 %v180
    %871 = vmatpush.msra.mxu0 %v178
    %872 = vmatpush.msra.mxu0 %v176
    %873 = vmatpush.msra.mxu0 %v174
    %874 = vmatpush.msra.mxu0 %v172
    %875 = vmatpush.msra.mxu0 %v170
    %876 = vmatpush.msra.mxu0 %v168
    %877 = vmatpush.msra.mxu0 %v166
    %878 = vmatpush.msra.mxu0 %v164
    %879 = vmatpush.msra.mxu0 %v162
    %880 = vmatpush.msra.mxu0 %v160
    %881 = vmatpush.msra.mxu0 %v158
    %882 = vmatpush.msra.mxu0 %v156
    %883 = vmatmul.f32.gmra.mxu0 %v866
    %v884 = vpop.f32.mrf.mxu0
    %v885 = vadd.f32 %v321, %v884
    %886 = vdwg.mxu0
    %887 = vmatpush.msra.mxu0 %v187
    %888 = vmatpush.msra.mxu0 %v185
    %889 = vmatpush.msra.mxu0 %v183
    %890 = vmatpush.msra.mxu0 %v181
    %891 = vmatpush.msra.mxu0 %v179
    %892 = vmatpush.msra.mxu0 %v177
    %893 = vmatpush.msra.mxu0 %v175
    %894 = vmatpush.msra.mxu0 %v173
    %895 = vmatpush.msra.mxu0 %v171
    %896 = vmatpush.msra.mxu0 %v169
    %897 = vmatpush.msra.mxu0 %v167
    %898 = vmatpush.msra.mxu0 %v165
    %899 = vmatpush.msra.mxu0 %v163
    %900 = vmatpush.msra.mxu0 %v161
    %901 = vmatpush.msra.mxu0 %v159
    %902 = vmatpush.msra.mxu0 %v157
    %903 = vmatmul.f32.gmra.mxu0 %v866
    %v904 = vpop.f32.mrf.mxu0
    %v905 = vadd.f32 %v322, %v904
    %906 = vdwg.mxu0
    %v907 = vtanh.pop %v885
    %v908 = vtanh.pop %v905
    %v909 = vmul.f32 %v907, 0.5
    %v910 = vadd.f32 %v909, 0.5
    %v911 = vmul.f32 %v908, 0.5
    %v912 = vadd.f32 %v911, 0.5
    %v913 = vmul.f32 %v910, %v800
    %v914 = vmul.f32 %v910, %v908
    %916 = vrot.lane.b32.xlu0 %v914, 64
    %v917 = vpop.permute.xlu0 %916
    %v919 = vadd.f32 %v913, %v917
    %v920 = vtanh.pop %v919
    %v921 = vmul.f32 %v912, %v920
    %v922 = vsel %vm325, %v864, 0
    %924 = vmatpush.msra.mxu0 0.0
    %925 = vmatpush.msra.mxu0 0.0
    %926 = vmatpush.msra.mxu0 0.0
    %927 = vmatpush.msra.mxu0 0.0
    %928 = vmatpush.msra.mxu0 0.0
    %929 = vmatpush.msra.mxu0 0.0
    %930 = vmatpush.msra.mxu0 0.0
    %931 = vmatpush.msra.mxu0 0.0
    %932 = vmatpush.msra.mxu0 %v120
    %933 = vmatpush.msra.mxu0 %v118
    %934 = vmatpush.msra.mxu0 %v116
    %935 = vmatpush.msra.mxu0 %v114
    %936 = vmatpush.msra.mxu0 %v112
    %937 = vmatpush.msra.mxu0 %v110
    %938 = vmatpush.msra.mxu0 %v108
    %939 = vmatpush.msra.mxu0 %v106
    %940 = vmatmul.f32.gmra.mxu0 %v922
    %v941 = vpop.f32.mrf.mxu0
    %v942 = vadd.f32 0.0, %v941
    %943 = vdwg.mxu0
    %944 = vmatpush.msra.mxu0 0.0
    %945 = vmatpush.msra.mxu0 0.0
    %946 = vmatpush.msra.mxu0 0.0
    %947 = vmatpush.msra.mxu0 0.0
    %948 = vmatpush.msra.mxu0 0.0
    %949 = vmatpush.msra.mxu0 0.0
    %950 = vmatpush.msra.mxu0 0.0
    %951 = vmatpush.msra.mxu0 0.0
    %952 = vmatpush.msra.mxu0 %v121
    %953 = vmatpush.msra.mxu0 %v119
    %954 = vmatpush.msra.mxu0 %v117
    %955 = vmatpush.msra.mxu0 %v115
    %956 = vmatpush.msra.mxu0 %v113
    %957 = vmatpush.msra.mxu0 %v111
    %958 = vmatpush.msra.mxu0 %v109
    %959 = vmatpush.msra.mxu0 %v107
    %960 = vmatmul.f32.gmra.mxu0 %v922
    %v961 = vpop.f32.mrf.mxu0
    %v962 = vadd.f32 0.0, %v961
    %963 = vdwg.mxu0
    %v964 = vadd.f32 %v314, %v942
    %v965 = vadd.f32 %v315, %v962
    %v966 = vtanh.pop %v964
    %v967 = vtanh.pop %v965
    %v968 = vmul.f32 %v966, 0.5
    %v969 = vadd.f32 %v968, 0.5
    %v970 = vmul.f32 %v967, 0.5
    %v971 = vadd.f32 %v970, 0.5
    %v972 = vmul.f32 %v969, %v859
    %v973 = vmul.f32 %v969, %v967
    %975 = vrot.lane.b32.xlu0 %v973, 64
    %v976 = vpop.permute.xlu0 %975
    %v978 = vadd.f32 %v972, %v976
    %v979 = vtanh.pop %v978
    %v980 = vmul.f32 %v971, %v979
    %982 = vrot.lane.b32.xlu0 %v980, 64
    %v983 = vpop.permute.xlu0 %982
    %v985 = vsel %vm325, %v983, %v921
    %986 = vmatpush.msra.mxu0 %v186
    %987 = vmatpush.msra.mxu0 %v184
    %988 = vmatpush.msra.mxu0 %v182
    %989 = vmatpush.msra.mxu0 %v180
    %990 = vmatpush.msra.mxu0 %v178
    %991 = vmatpush.msra.mxu0 %v176
    %992 = vmatpush.msra.mxu0 %v174
    %993 = vmatpush.msra.mxu0 %v172
    %994 = vmatpush.msra.mxu0 %v170
    %995 = vmatpush.msra.mxu0 %v168
    %996 = vmatpush.msra.mxu0 %v166
    %997 = vmatpush.msra.mxu0 %v164
    %998 = vmatpush.msra.mxu0 %v162
    %999 = vmatpush.msra.mxu0 %v160
    %1000 = vmatpush.msra.mxu0 %v158
    %1001 = vmatpush.msra.mxu0 %v156
    %1002 = vmatmul.f32.gmra.mxu0 %v985
    %v1003 = vpop.f32.mrf.mxu0
    %v1004 = vadd.f32 %v321, %v1003
    %1005 = vdwg.mxu0
    %1006 = vmatpush.msra.mxu0 %v187
    %1007 = vmatpush.msra.mxu0 %v185
    %1008 = vmatpush.msra.mxu0 %v183
    %1009 = vmatpush.msra.mxu0 %v181
    %1010 = vmatpush.msra.mxu0 %v179
    %1011 = vmatpush.msra.mxu0 %v177
    %1012 = vmatpush.msra.mxu0 %v175
    %1013 = vmatpush.msra.mxu0 %v173
    %1014 = vmatpush.msra.mxu0 %v171
    %1015 = vmatpush.msra.mxu0 %v169
    %1016 = vmatpush.msra.mxu0 %v167
    %1017 = vmatpush.msra.mxu0 %v165
    %1018 = vmatpush.msra.mxu0 %v163
    %1019 = vmatpush.msra.mxu0 %v161
    %1020 = vmatpush.msra.mxu0 %v159
    %1021 = vmatpush.msra.mxu0 %v157
    %1022 = vmatmul.f32.gmra.mxu0 %v985
    %v1023 = vpop.f32.mrf.mxu0
    %v1024 = vadd.f32 %v322, %v1023
    %1025 = vdwg.mxu0
    %v1026 = vtanh.pop %v1004
    %v1027 = vtanh.pop %v1024
    %v1028 = vmul.f32 %v1026, 0.5
    %v1029 = vadd.f32 %v1028, 0.5
    %v1030 = vmul.f32 %v1027, 0.5
    %v1031 = vadd.f32 %v1030, 0.5
    %v1032 = vmul.f32 %v1029, %v919
    %v1033 = vmul.f32 %v1029, %v1027
    %1035 = vrot.lane.b32.xlu0 %v1033, 64
    %v1036 = vpop.permute.xlu0 %1035
    %v1038 = vadd.f32 %v1032, %v1036
    %v1039 = vtanh.pop %v1038
    %v1040 = vmul.f32 %v1031, %v1039
    %v1041 = vsel %vm325, %v983, 0
    %1043 = vmatpush.msra.mxu0 0.0
    %1044 = vmatpush.msra.mxu0 0.0
    %1045 = vmatpush.msra.mxu0 0.0
    %1046 = vmatpush.msra.mxu0 0.0
    %1047 = vmatpush.msra.mxu0 0.0
    %1048 = vmatpush.msra.mxu0 0.0
    %1049 = vmatpush.msra.mxu0 0.0
    %1050 = vmatpush.msra.mxu0 0.0
    %1051 = vmatpush.msra.mxu0 %v120
    %1052 = vmatpush.msra.mxu0 %v118
    %1053 = vmatpush.msra.mxu0 %v116
    %1054 = vmatpush.msra.mxu0 %v114
    %1055 = vmatpush.msra.mxu0 %v112
    %1056 = vmatpush.msra.mxu0 %v110
    %1057 = vmatpush.msra.mxu0 %v108
    %1058 = vmatpush.msra.mxu0 %v106
    %1059 = vmatmul.f32.gmra.mxu0 %v1041
    %v1060 = vpop.f32.mrf.mxu0
    %v1061 = vadd.f32 0.0, %v1060
    %1062 = vdwg.mxu0
    %1063 = vmatpush.msra.mxu0 0.0
    %1064 = vmatpush.msra.mxu0 0.0
    %1065 = vmatpush.msra.mxu0 0.0
    %1066 = vmatpush.msra.mxu0 0.0
    %1067 = vmatpush.msra.mxu0 0.0
    %1068 = vmatpush.msra.mxu0 0.0
    %1069 = vmatpush.msra.mxu0 0.0
    %1070 = vmatpush.msra.mxu0 0.0
    %1071 = vmatpush.msra.mxu0 %v121
    %1072 = vmatpush.msra.mxu0 %v119
    %1073 = vmatpush.msra.mxu0 %v117
    %1074 = vmatpush.msra.mxu0 %v115
    %1075 = vmatpush.msra.mxu0 %v113
    %1076 = vmatpush.msra.mxu0 %v111
    %1077 = vmatpush.msra.mxu0 %v109
    %1078 = vmatpush.msra.mxu0 %v107
    %1079 = vmatmul.f32.gmra.mxu0 %v1041
    %v1080 = vpop.f32.mrf.mxu0
    %v1081 = vadd.f32 0.0, %v1080
    %1082 = vdwg.mxu0
    %v1083 = vadd.f32 %v316, %v1061
    %v1084 = vadd.f32 %v317, %v1081
    %v1085 = vtanh.pop %v1083
    %v1086 = vtanh.pop %v1084
    %v1087 = vmul.f32 %v1085, 0.5
    %v1088 = vadd.f32 %v1087, 0.5
    %v1089 = vmul.f32 %v1086, 0.5
    %v1090 = vadd.f32 %v1089, 0.5
    %v1091 = vmul.f32 %v1088, %v978
    %v1092 = vmul.f32 %v1088, %v1086
    %1094 = vrot.lane.b32.xlu0 %v1092, 64
    %v1095 = vpop.permute.xlu0 %1094
    %v1097 = vadd.f32 %v1091, %v1095
    %v1098 = vtanh.pop %v1097
    %v1099 = vmul.f32 %v1090, %v1098
    %1101 = vrot.lane.b32.xlu0 %v1099, 64
    %v1102 = vpop.permute.xlu0 %1101
    %v1104 = vsel %vm325, %v1102, %v1040
    %1105 = vmatpush.msra.mxu0 %v186
    %1106 = vmatpush.msra.mxu0 %v184
    %1107 = vmatpush.msra.mxu0 %v182
    %1108 = vmatpush.msra.mxu0 %v180
    %1109 = vmatpush.msra.mxu0 %v178
    %1110 = vmatpush.msra.mxu0 %v176
    %1111 = vmatpush.msra.mxu0 %v174
    %1112 = vmatpush.msra.mxu0 %v172
    %1113 = vmatpush.msra.mxu0 %v170
    %1114 = vmatpush.msra.mxu0 %v168
    %1115 = vmatpush.msra.mxu0 %v166
    %1116 = vmatpush.msra.mxu0 %v164
    %1117 = vmatpush.msra.mxu0 %v162
    %1118 = vmatpush.msra.mxu0 %v160
    %1119 = vmatpush.msra.mxu0 %v158
    %1120 = vmatpush.msra.mxu0 %v156
    %1121 = vmatmul.f32.gmra.mxu0 %v1104
    %v1122 = vpop.f32.mrf.mxu0
    %v1123 = vadd.f32 %v321, %v1122
    %1124 = vdwg.mxu0
    %1125 = vmatpush.msra.mxu0 %v187
    %1126 = vmatpush.msra.mxu0 %v185
    %1127 = vmatpush.msra.mxu0 %v183
    %1128 = vmatpush.msra.mxu0 %v181
    %1129 = vmatpush.msra.mxu0 %v179
    %1130 = vmatpush.msra.mxu0 %v177
    %1131 = vmatpush.msra.mxu0 %v175
    %1132 = vmatpush.msra.mxu0 %v173
    %1133 = vmatpush.msra.mxu0 %v171
    %1134 = vmatpush.msra.mxu0 %v169
    %1135 = vmatpush.msra.mxu0 %v167
    %1136 = vmatpush.msra.mxu0 %v165
    %1137 = vmatpush.msra.mxu0 %v163
    %1138 = vmatpush.msra.mxu0 %v161
    %1139 = vmatpush.msra.mxu0 %v159
    %1140 = vmatpush.msra.mxu0 %v157
    %1141 = vmatmul.f32.gmra.mxu0 %v1104
    %v1142 = vpop.f32.mrf.mxu0
    %v1143 = vadd.f32 %v322, %v1142
    %1144 = vdwg.mxu0
    %v1145 = vtanh.pop %v1123
    %v1146 = vtanh.pop %v1143
    %v1147 = vmul.f32 %v1145, 0.5
    %v1148 = vadd.f32 %v1147, 0.5
    %v1149 = vmul.f32 %v1146, 0.5
    %v1150 = vadd.f32 %v1149, 0.5
    %v1151 = vmul.f32 %v1148, %v1038
    %v1152 = vmul.f32 %v1148, %v1146
    %1154 = vrot.lane.b32.xlu0 %v1152, 64
    %v1155 = vpop.permute.xlu0 %1154
    %v1157 = vadd.f32 %v1151, %v1155
    %v1158 = vtanh.pop %v1157
    %v1159 = vmul.f32 %v1150, %v1158
    %v1160 = vsel %vm325, %v1102, 0
    %1162 = vmatpush.msra.mxu0 0.0
    %1163 = vmatpush.msra.mxu0 0.0
    %1164 = vmatpush.msra.mxu0 0.0
    %1165 = vmatpush.msra.mxu0 0.0
    %1166 = vmatpush.msra.mxu0 0.0
    %1167 = vmatpush.msra.mxu0 0.0
    %1168 = vmatpush.msra.mxu0 0.0
    %1169 = vmatpush.msra.mxu0 0.0
    %1170 = vmatpush.msra.mxu0 %v120
    %1171 = vmatpush.msra.mxu0 %v118
    %1172 = vmatpush.msra.mxu0 %v116
    %1173 = vmatpush.msra.mxu0 %v114
    %1174 = vmatpush.msra.mxu0 %v112
    %1175 = vmatpush.msra.mxu0 %v110
    %1176 = vmatpush.msra.mxu0 %v108
    %1177 = vmatpush.msra.mxu0 %v106
    %1178 = vmatmul.f32.gmra.mxu0 %v1160
    %v1179 = vpop.f32.mrf.mxu0
    %v1180 = vadd.f32 0.0, %v1179
    %1181 = vdwg.mxu0
    %1182 = vmatpush.msra.mxu0 0.0
    %1183 = vmatpush.msra.mxu0 0.0
    %1184 = vmatpush.msra.mxu0 0.0
    %1185 = vmatpush.msra.mxu0 0.0
    %1186 = vmatpush.msra.mxu0 0.0
    %1187 = vmatpush.msra.mxu0 0.0
    %1188 = vmatpush.msra.mxu0 0.0
    %1189 = vmatpush.msra.mxu0 0.0
    %1190 = vmatpush.msra.mxu0 %v121
    %1191 = vmatpush.msra.mxu0 %v119
    %1192 = vmatpush.msra.mxu0 %v117
    %1193 = vmatpush.msra.mxu0 %v115
    %1194 = vmatpush.msra.mxu0 %v113
    %1195 = vmatpush.msra.mxu0 %v111
    %1196 = vmatpush.msra.mxu0 %v109
    %1197 = vmatpush.msra.mxu0 %v107
    %1198 = vmatmul.f32.gmra.mxu0 %v1160
    %v1199 = vpop.f32.mrf.mxu0
    %v1200 = vadd.f32 0.0, %v1199
    %1201 = vdwg.mxu0
    %v1202 = vadd.f32 %v318, %v1180
    %v1203 = vadd.f32 %v319, %v1200
    %v1204 = vtanh.pop %v1202
    %v1205 = vtanh.pop %v1203
    %v1206 = vmul.f32 %v1204, 0.5
    %v1207 = vadd.f32 %v1206, 0.5
    %v1208 = vmul.f32 %v1205, 0.5
    %v1209 = vadd.f32 %v1208, 0.5
    %v1210 = vmul.f32 %v1207, %v1097
    %v1211 = vmul.f32 %v1207, %v1205
    %1213 = vrot.lane.b32.xlu0 %v1211, 64
    %v1214 = vpop.permute.xlu0 %1213
    %v1216 = vadd.f32 %v1210, %v1214
    %v1217 = vtanh.pop %v1216
    %v1218 = vmul.f32 %v1209, %v1217
    %1220 = vrot.lane.b32.xlu0 %v1218, 64
    %v1221 = vpop.permute.xlu0 %1220
    %v1223 = vsel %vm325, %v1221, %v1159
    %1224 = vmatpush.msra.mxu0 %v186
    %1225 = vmatpush.msra.mxu0 %v184
    %1226 = vmatpush.msra.mxu0 %v182
    %1227 = vmatpush.msra.mxu0 %v180
    %1228 = vmatpush.msra.mxu0 %v178
    %1229 = vmatpush.msra.mxu0 %v176
    %1230 = vmatpush.msra.mxu0 %v174
    %1231 = vmatpush.msra.mxu0 %v172
    %1232 = vmatpush.msra.mxu0 %v170
    %1233 = vmatpush.msra.mxu0 %v168
    %1234 = vmatpush.msra.mxu0 %v166
    %1235 = vmatpush.msra.mxu0 %v164
    %1236 = vmatpush.msra.mxu0 %v162
    %1237 = vmatpush.msra.mxu0 %v160
    %1238 = vmatpush.msra.mxu0 %v158
    %1239 = vmatpush.msra.mxu0 %v156
    %1240 = vmatmul.f32.gmra.mxu0 %v1223
    %v1241 = vpop.f32.mrf.mxu0
    %v1242 = vadd.f32 %v321, %v1241
    %1243 = vdwg.mxu0
    %1244 = vmatpush.msra.mxu0 %v187
    %1245 = vmatpush.msra.mxu0 %v185
    %1246 = vmatpush.msra.mxu0 %v183
    %1247 = vmatpush.msra.mxu0 %v181
    %1248 = vmatpush.msra.mxu0 %v179
    %1249 = vmatpush.msra.mxu0 %v177
    %1250 = vmatpush.msra.mxu0 %v175
    %1251 = vmatpush.msra.mxu0 %v173
    %1252 = vmatpush.msra.mxu0 %v171
    %1253 = vmatpush.msra.mxu0 %v169
    %1254 = vmatpush.msra.mxu0 %v167
    %1255 = vmatpush.msra.mxu0 %v165
    %1256 = vmatpush.msra.mxu0 %v163
    %1257 = vmatpush.msra.mxu0 %v161
    %1258 = vmatpush.msra.mxu0 %v159
    %1259 = vmatpush.msra.mxu0 %v157
    %1260 = vmatmul.f32.gmra.mxu0 %v1223
    %v1261 = vpop.f32.mrf.mxu0
    %v1262 = vadd.f32 %v322, %v1261
    %1263 = vdwg.mxu0
    %v1264 = vtanh.pop %v1242
    %v1265 = vtanh.pop %v1262
    %v1266 = vmul.f32 %v1264, 0.5
    %v1267 = vadd.f32 %v1266, 0.5
    %v1268 = vmul.f32 %v1265, 0.5
    %v1269 = vadd.f32 %v1268, 0.5
    %v1270 = vmul.f32 %v1267, %v1157
    %v1271 = vmul.f32 %v1267, %v1265
    %1273 = vrot.lane.b32.xlu0 %v1271, 64
    %v1274 = vpop.permute.xlu0 %1273
    %v1276 = vadd.f32 %v1270, %v1274
    %v1277 = vtanh.pop %v1276
    %v1278 = vmul.f32 %v1269, %v1277
    %v1280 = vperm.slane %v70, 0
    %1283 = vrot.lane.b32.xlu0 %v1278, 64
    %v1284 = vpop.permute.xlu0 %1283
    %v1285 = vsel %vm325, %v1284, 0
    %1287 = vmatpush.msra.mxu0 0.0
    %1288 = vmatpush.msra.mxu0 0.0
    %1289 = vmatpush.msra.mxu0 0.0
    %1290 = vmatpush.msra.mxu0 0.0
    %1291 = vmatpush.msra.mxu0 0.0
    %1292 = vmatpush.msra.mxu0 0.0
    %1293 = vmatpush.msra.mxu0 0.0
    %1294 = vmatpush.msra.mxu0 0.0
    %1295 = vmatpush.msra.mxu0 %v69
    %1296 = vmatpush.msra.mxu0 %v68
    %1297 = vmatpush.msra.mxu0 %v67
    %1298 = vmatpush.msra.mxu0 %v66
    %1299 = vmatpush.msra.mxu0 %v65
    %1300 = vmatpush.msra.mxu0 %v64
    %1301 = vmatpush.msra.mxu0 %v63
    %1302 = vmatpush.msra.mxu0 %v62
    %1303 = vmatmul.f32.gmra.mxu0 %v1285
    %v1304 = vpop.f32.mrf.mxu0
    %v1305 = vadd.f32 %v1280, %v1304
    %1306 = vdwg.mxu0
    %vm1307 = vcmask 23552
    %1308 = vst.msk [vmem:[%s8] sm:$0xff] %vm1307, %v1305
    // Predicated region
    $region42: #{tpu_custom_call.1} parent=1 // pred_check
      _
    $region43: #{tpu_custom_call.1} parent=1 // pred_check_branch
      %1310 = sbr.rel (0) target = $region45
    $region44: #{tpu_custom_call.1} parent=1 // pred_region
      _
    $region45: #{tpu_custom_call.1} parent=1 // pred_fallthru
      _
    // Predicated region
    $region46: #{tpu_custom_call.1} parent=1 // pred_check
      _
    $region47: #{tpu_custom_call.1} parent=1 // pred_check_branch
      %1312 = sbr.rel (0) target = $region49
    $region48: #{tpu_custom_call.1} parent=1 // pred_region
      _
    $region49: #{tpu_custom_call.1} parent=1 // pred_fallthru
      _
    %1313 = vsyncpa [#allocation3], 1
    %1314 = vsyncpa [#allocation5], 1

</llo_original>
